<compile_context>
chip_gen: v7x
topology: tpu7x:2x2x1
jax: 0.10.0
libtpu: 0.0.40
codegen_flags: <defaults>
</compile_context>

<pallas_src>
import numpy as np
import jax
import jax.numpy as jnp
from jax import lax
from jax.experimental import pallas as pl
from jax.experimental.pallas import tpu as pltpu

# ---- small, module-consistent hyper-parameters -------------------------------
VOCAB_SIZE = 10          # embedding has vocab_size + 1 rows, row 0 = pad
MAX_SEQ_LEN = 8
NUM_LAYERS = 2
MODEL_DIM = 32
NUM_HEADS = 4
FFN_DIM = 64
LN_EPS = 1e-5            # PyTorch nn.LayerNorm default


# ------------------------------ Pallas kernel ---------------------------------
def _layernorm(x, gamma, beta):
    # one-pass variance: E[x^2] - mu^2 (one fewer VALU pass over the slab)
    mu = jnp.mean(x, axis=-1, keepdims=True)
    ms = jnp.mean(x * x, axis=-1, keepdims=True)
    var = ms - mu * mu
    return (x - mu) * lax.rsqrt(var + LN_EPS) * gamma + beta


def encoder_stack_kernel(x_ref, mask_ref, sel_ref, gsum_ref,
                         wqkv_ref, bqkv_ref, wo_ref, bo_ref, g1_ref, be1_ref,
                         w1_ref, b1_ref, w2_ref, b2_ref, g2_ref, be2_ref,
                         out_ref, attn_ref):
    x = x_ref[...]                # (BL, D) f32, batch folded into rows
    mask = mask_ref[...]          # (BL, H*BL) additive: -1e9 on pad + cross-batch keys
    sel = sel_ref[...]            # (H*BL, D)    sel[r,c]  = (r//BL == c//Dh)
    gsum = gsum_ref[...]          # (H*BL, H*BL) gsum[r,c] = (r//BL == c//BL)
    BL, D = x.shape
    H = NUM_HEADS

    p_layers = []
    # static unroll over layers: all stacked weights stay VMEM-resident
    # TODO(synk): if NUM_LAYERS/MODEL_DIM/SEQ_LEN are scaled up, move this loop
    # onto an "arbitrary" grid axis and index the stacked weights per layer.
    for li in range(NUM_LAYERS):
        # fused QKV projection; 1/sqrt(Dh) already folded into the Q columns
        qkv = jnp.dot(x.astype(jnp.bfloat16), wqkv_ref[li],
                      preferred_element_type=jnp.float32) + bqkv_ref[li]
        q = qkv[:, 0:D]
        k = qkv[:, D:2 * D]
        v = qkv[:, 2 * D:3 * D]

        # head-block-diagonal K / V: ksel[h*BL + j, d] = k[j, d] * [d in head h]
        ksel = (jnp.concatenate([k] * H, axis=0) * sel).astype(jnp.bfloat16)
        vsel = (jnp.concatenate([v] * H, axis=0) * sel).astype(jnp.bfloat16)

        # all-head scores in ONE MXU contraction: s[i, h*BL + j] = q_h[i]·k_h[j]
        s = lax.dot_general(q.astype(jnp.bfloat16), ksel,
                            (((1,), (1,)), ((), ())),
                            preferred_element_type=jnp.float32) + mask
        s = s - jnp.max(s, axis=-1, keepdims=True)   # row max; softmax-invariant
        e = jnp.exp(s)
        # per-head denominators: segmented sum + broadcast via one f32 matmul
        denom = jnp.dot(e, gsum, preferred_element_type=jnp.float32)
        p = e / denom                                 # exact normalization
        p_layers.append(p)

        # multi-head context, already lane-concatenated over heads: (BL, D)
        ctx = jnp.dot(p.astype(jnp.bfloat16), vsel,
                      preferred_element_type=jnp.float32)
        attn_out = jnp.dot(ctx.astype(jnp.bfloat16), wo_ref[li],
                           preferred_element_type=jnp.float32) + bo_ref[li]

        # residual + LayerNorm, then position-wise FFN (Conv1d k=1 == Linear)
        y1 = _layernorm(x + attn_out, g1_ref[li], be1_ref[li])
        hid = jnp.maximum(
            jnp.dot(y1.astype(jnp.bfloat16), w1_ref[li],
                    preferred_element_type=jnp.float32) + b1_ref[li], 0.0)
        ffn = jnp.dot(hid.astype(jnp.bfloat16), w2_ref[li],
                      preferred_element_type=jnp.float32) + b2_ref[li]
        x = _layernorm(y1 + ffn, g2_ref[li], be2_ref[li])

    out_ref[...] = x
    # single fully lane-dense store: (BL, NL*H*BL) = (16, 128)
    attn_ref[...] = jnp.concatenate(p_layers, axis=-1)


_WEIGHT_ORDER = ["wqkv", "bqkv", "wo", "bo", "g1", "be1",
                 "w1", "b1", "w2", "b2", "g2", "be2"]


def encoder_stack(x2d, mask_big, layer_params):
    """(B*L, D) activations + (B*L, H*B*L) mask -> ((B*L, D), (B*L, NL*H*B*L))."""
    BL, D = x2d.shape
    H, NL = NUM_HEADS, NUM_LAYERS
    Dh = D // H
    HBL = H * BL

    # constant selector / group-sum matrices (built once on host)
    r = np.arange(HBL)
    sel = jnp.asarray((r[:, None] // BL == np.arange(D)[None, :] // Dh),
                      dtype=jnp.float32)                      # (H*BL, D)
    gsum = jnp.asarray((r[:, None] // BL == r[None, :] // BL),
                       dtype=jnp.float32)                     # (H*BL, H*BL)

    weight_args = [layer_params[n] for n in _WEIGHT_ORDER]
    vmem = pl.BlockSpec(memory_space=pltpu.MemorySpace.VMEM)

    out2d, attn_dense = pl.pallas_call(
        encoder_stack_kernel,
        out_shape=(jax.ShapeDtypeStruct((BL, D), jnp.float32),
                   jax.ShapeDtypeStruct((BL, NL * HBL), jnp.float32)),
        in_specs=[vmem] * (4 + len(weight_args)),
        out_specs=(vmem, vmem),
    )(x2d, mask_big, sel, gsum, *weight_args)
    return out2d, attn_dense


# ------------------------------ plain-JAX glue ---------------------------------
def positional_encoding_table(d_model, max_seq_len):
    pos = np.arange(max_seq_len, dtype=np.float64)[:, None]
    j = np.arange(d_model, dtype=np.float64)[None, :]
    angle = pos / np.power(10000.0, 2.0 * np.floor(j / 2.0) / d_model)
    pe = np.zeros((max_seq_len, d_model), dtype=np.float64)
    pe[:, 0::2] = np.sin(angle[:, 0::2])
    pe[:, 1::2] = np.cos(angle[:, 1::2])
    pad_row = np.zeros((1, d_model))
    return jnp.asarray(np.concatenate([pad_row, pe], axis=0), dtype=jnp.float32)


def init_params(key):
    keys = jax.random.split(key, 1 + NUM_LAYERS)
    scale = 0.02
    seq_emb = scale * jax.random.normal(keys[0], (VOCAB_SIZE + 1, MODEL_DIM), jnp.float32)
    seq_emb = seq_emb.at[0].set(0.0)                       # padding_idx = 0
    D, F, NL = MODEL_DIM, FFN_DIM, NUM_LAYERS
    q_scale = (D // NUM_HEADS) ** -0.5                     # folded into Wq / bq

    wqkv, wo, w1, w2 = [], [], [], []
    for li in range(NL):
        ks = jax.random.split(keys[1 + li], 4)
        w = scale * jax.random.normal(ks[0], (D, 3 * D), jnp.float32)
        w = w.at[:, 0:D].multiply(q_scale)                 # fold 1/sqrt(Dh) into Q cols
        wqkv.append(w)
        wo.append(scale * jax.random.normal(ks[1], (D, D), jnp.float32))
        w1.append(scale * jax.random.normal(ks[2], (D, F), jnp.float32))
        w2.append(scale * jax.random.normal(ks[3], (F, D), jnp.float32))

    layers = {
        # MXU operands stacked in bf16; accumulation stays f32 in-kernel
        "wqkv": jnp.stack(wqkv).astype(jnp.bfloat16),
        "bqkv": jnp.zeros((NL, 1, 3 * D), jnp.float32),    # (Q block would also carry q_scale)
        "wo": jnp.stack(wo).astype(jnp.bfloat16),
        "bo": jnp.zeros((NL, 1, D), jnp.float32),
        "g1": jnp.ones((NL, 1, D), jnp.float32),
        "be1": jnp.zeros((NL, 1, D), jnp.float32),
        "w1": jnp.stack(w1).astype(jnp.bfloat16),
        "b1": jnp.zeros((NL, 1, F), jnp.float32),
        "w2": jnp.stack(w2).astype(jnp.bfloat16),
        "b2": jnp.zeros((NL, 1, D), jnp.float32),
        "g2": jnp.ones((NL, 1, D), jnp.float32),
        "be2": jnp.zeros((NL, 1, D), jnp.float32),
    }
    return {"seq_emb": seq_emb,
            "pos_table": positional_encoding_table(MODEL_DIM, MAX_SEQ_LEN),
            "layers": layers}


def encoder_forward(tokens, input_lens, params):
    """tokens: (B, L) int32 (0 = pad); input_lens: (B,) host ints."""
    B, L = tokens.shape
    D, H, NL = MODEL_DIM, NUM_HEADS, NUM_LAYERS
    BL = B * L

    # word embedding (gather kept in plain JAX)
    emb = jnp.take(params["seq_emb"], tokens, axis=0)                  # (B, L, D)

    # positional embedding: positions 1..len, 0 for padding (matches reference)
    lens = np.asarray(input_lens)
    pos_idx = np.zeros((B, L), dtype=np.int32)
    for b in range(B):
        pos_idx[b, : lens[b]] = np.arange(1, lens[b] + 1)
    pos_emb = jnp.take(params["pos_table"], jnp.asarray(pos_idx), axis=0)
    x2d = (emb + pos_emb).astype(jnp.float32).reshape(BL, D)

    # additive attention mask over the folded rows:
    #   -1e9 on padded keys and on cross-batch key pairs, tiled per head.
    key_valid = (tokens != 0).reshape(BL)
    batch_id = jnp.repeat(jnp.arange(B), L)
    ok = (batch_id[:, None] == batch_id[None, :]) & key_valid[None, :]
    mask_big = jnp.tile(jnp.where(ok, 0.0, -1e9).astype(jnp.float32), (1, H))

    out2d, attn_dense = encoder_stack(x2d, mask_big, params["layers"])

    out = out2d.reshape(B, L, D)
    # (BL, NL*H*BL) lane-dense slab -> one (B, H, L, L) attention map per layer
    a6 = attn_dense.reshape(B, L, NL, H, B, L)
    attns = []
    for li in range(NL):
        per_b = [a6[b, :, li, :, b, :] for b in range(B)]       # (L, H, L) each
        attns.append(jnp.transpose(jnp.stack(per_b, axis=0), (0, 2, 1, 3)))
    return out, attns


# ----------------------------------- main --------------------------------------
if __name__ == "__main__":
    key = jax.random.PRNGKey(0)
    pkey, tkey = jax.random.split(key)
    params = init_params(pkey)

    B, L = 2, MAX_SEQ_LEN
    input_lens = np.array([8, 5], dtype=np.int32)

    # deterministic token ids in [1, VOCAB_SIZE], zero-padded past each length
    tok = jax.random.randint(tkey, (B, L), 1, VOCAB_SIZE + 1, dtype=jnp.int32)
    valid = np.zeros((B, L), dtype=np.int32)
    for b in range(B):
        valid[b, : input_lens[b]] = 1
    tokens = tok * jnp.asarray(valid)

    out, attns = encoder_forward(tokens, input_lens, params)
    out = jax.block_until_ready(out)
    attns = [jax.block_until_ready(a) for a in attns]

    assert out.shape == (B, L, MODEL_DIM)
    assert all(a.shape == (B, NUM_HEADS, L, L) for a in attns)
    assert np.isfinite(np.asarray(out)).all()
    for a in attns:
        a = np.asarray(a)
        assert np.isfinite(a).all()
        assert np.allclose(a.sum(-1), 1.0, atol=1e-3)   # rows are valid softmaxes
    print("KERNEL_OK")
</pallas_src>

<mosaic_0001>
module attributes {stable_mosaic.version = 11 : i64} {
  func.func @encoder_stack_kernel(%arg0: memref<16x32xf32, #tpu.memory_space<vmem>>, %arg1: memref<16x64xf32, #tpu.memory_space<vmem>>, %arg2: memref<64x32xf32, #tpu.memory_space<vmem>>, %arg3: memref<64x64xf32, #tpu.memory_space<vmem>>, %arg4: memref<2x32x96xbf16, #tpu.memory_space<vmem>>, %arg5: memref<2x1x96xf32, #tpu.memory_space<vmem>>, %arg6: memref<2x32x32xbf16, #tpu.memory_space<vmem>>, %arg7: memref<2x1x32xf32, #tpu.memory_space<vmem>>, %arg8: memref<2x1x32xf32, #tpu.memory_space<vmem>>, %arg9: memref<2x1x32xf32, #tpu.memory_space<vmem>>, %arg10: memref<2x32x64xbf16, #tpu.memory_space<vmem>>, %arg11: memref<2x1x64xf32, #tpu.memory_space<vmem>>, %arg12: memref<2x64x32xbf16, #tpu.memory_space<vmem>>, %arg13: memref<2x1x32xf32, #tpu.memory_space<vmem>>, %arg14: memref<2x1x32xf32, #tpu.memory_space<vmem>>, %arg15: memref<2x1x32xf32, #tpu.memory_space<vmem>>, %arg16: memref<16x32xf32, #tpu.memory_space<vmem>>, %arg17: memref<16x128xf32, #tpu.memory_space<vmem>>) attributes {dimension_semantics = [], scalar_prefetch = 0 : i64, scratch_operands = 0 : i64, tpu.core_type = #tpu.core_type<tc>} {
    %c0 = arith.constant 0 : index
    %c0_0 = arith.constant 0 : index
    %0 = vector.load %arg0[%c0, %c0_0] : memref<16x32xf32, #tpu.memory_space<vmem>>, vector<16x32xf32>
    %c0_1 = arith.constant 0 : index
    %c0_2 = arith.constant 0 : index
    %1 = vector.load %arg1[%c0_1, %c0_2] : memref<16x64xf32, #tpu.memory_space<vmem>>, vector<16x64xf32>
    %c0_3 = arith.constant 0 : index
    %c0_4 = arith.constant 0 : index
    %2 = vector.load %arg2[%c0_3, %c0_4] : memref<64x32xf32, #tpu.memory_space<vmem>>, vector<64x32xf32>
    %c0_5 = arith.constant 0 : index
    %c0_6 = arith.constant 0 : index
    %3 = vector.load %arg3[%c0_5, %c0_6] : memref<64x64xf32, #tpu.memory_space<vmem>>, vector<64x64xf32>
    %4 = arith.truncf %0 : vector<16x32xf32> to vector<16x32xbf16>
    %c0_7 = arith.constant 0 : index
    %c0_8 = arith.constant 0 : index
    %c0_9 = arith.constant 0 : index
    %5 = vector.load %arg4[%c0_7, %c0_8, %c0_9] : memref<2x32x96xbf16, #tpu.memory_space<vmem>>, vector<1x32x96xbf16>
    %6 = vector.shape_cast %5 : vector<1x32x96xbf16> to vector<32x96xbf16>
    %cst = arith.constant dense<0.000000e+00> : vector<16x96xf32>
    %7 = tpu.matmul %4, %6, %cst {dimension_numbers = #tpu.dot_dimension_numbers<[1], [0], [0], [1], [0, 0, 1, 1], [], []>} : vector<16x32xbf16>, vector<32x96xbf16>, vector<16x96xf32> -> vector<16x96xf32>
    %c0_10 = arith.constant 0 : index
    %c0_11 = arith.constant 0 : index
    %c0_12 = arith.constant 0 : index
    %8 = vector.load %arg5[%c0_10, %c0_11, %c0_12] : memref<2x1x96xf32, #tpu.memory_space<vmem>>, vector<1x1x96xf32>
    %9 = vector.shape_cast %8 : vector<1x1x96xf32> to vector<1x96xf32>
    %10 = vector.broadcast %9 : vector<1x96xf32> to vector<16x96xf32>
    %11 = arith.addf %7, %10 : vector<16x96xf32>
    %12 = vector.extract_strided_slice %11 {offsets = [0, 0], sizes = [16, 32], strides = [1, 1]} : vector<16x96xf32> to vector<16x32xf32>
    %13 = vector.extract_strided_slice %11 {offsets = [0, 32], sizes = [16, 32], strides = [1, 1]} : vector<16x96xf32> to vector<16x32xf32>
    %14 = vector.extract_strided_slice %11 {offsets = [0, 64], sizes = [16, 32], strides = [1, 1]} : vector<16x96xf32> to vector<16x32xf32>
    %15 = tpu.concatenate %13, %13, %13, %13 in 0 : vector<16x32xf32>, vector<16x32xf32>, vector<16x32xf32>, vector<16x32xf32> -> vector<64x32xf32>
    %16 = arith.mulf %15, %2 : vector<64x32xf32>
    %17 = arith.truncf %16 : vector<64x32xf32> to vector<64x32xbf16>
    %18 = tpu.concatenate %14, %14, %14, %14 in 0 : vector<16x32xf32>, vector<16x32xf32>, vector<16x32xf32>, vector<16x32xf32> -> vector<64x32xf32>
    %19 = arith.mulf %18, %2 : vector<64x32xf32>
    %20 = arith.truncf %19 : vector<64x32xf32> to vector<64x32xbf16>
    %21 = arith.truncf %12 : vector<16x32xf32> to vector<16x32xbf16>
    %cst_13 = arith.constant dense<0.000000e+00> : vector<16x64xf32>
    %22 = tpu.matmul %21, %17, %cst_13 {dimension_numbers = #tpu.dot_dimension_numbers<[1], [1], [0], [0], [0, 0, 1, 0], [], []>} : vector<16x32xbf16>, vector<64x32xbf16>, vector<16x64xf32> -> vector<16x64xf32>
    %23 = arith.addf %22, %1 : vector<16x64xf32>
    %cst_14 = arith.constant dense<0xFF800000> : vector<16xf32>
    %24 = vector.multi_reduction <maximumf>, %23, %cst_14 [1] : vector<16x64xf32> to vector<16xf32>
    %25 = vector.shape_cast %24 : vector<16xf32> to vector<16x1xf32>
    %26 = vector.broadcast %25 : vector<16x1xf32> to vector<16x64xf32>
    %27 = arith.subf %23, %26 : vector<16x64xf32>
    %28 = math.exp %27 : vector<16x64xf32>
    %cst_15 = arith.constant dense<0.000000e+00> : vector<16x64xf32>
    %29 = tpu.matmul %28, %3, %cst_15 {dimension_numbers = #tpu.dot_dimension_numbers<[1], [0], [0], [1], [0, 0, 1, 1], [], []>} : vector<16x64xf32>, vector<64x64xf32>, vector<16x64xf32> -> vector<16x64xf32>
    %30 = arith.divf %28, %29 : vector<16x64xf32>
    %31 = arith.truncf %30 : vector<16x64xf32> to vector<16x64xbf16>
    %cst_16 = arith.constant dense<0.000000e+00> : vector<16x32xf32>
    %32 = tpu.matmul %31, %20, %cst_16 {dimension_numbers = #tpu.dot_dimension_numbers<[1], [0], [0], [1], [0, 0, 1, 1], [], []>} : vector<16x64xbf16>, vector<64x32xbf16>, vector<16x32xf32> -> vector<16x32xf32>
    %33 = arith.truncf %32 : vector<16x32xf32> to vector<16x32xbf16>
    %c0_17 = arith.constant 0 : index
    %c0_18 = arith.constant 0 : index
    %c0_19 = arith.constant 0 : index
    %34 = vector.load %arg6[%c0_17, %c0_18, %c0_19] : memref<2x32x32xbf16, #tpu.memory_space<vmem>>, vector<1x32x32xbf16>
    %35 = vector.shape_cast %34 : vector<1x32x32xbf16> to vector<32x32xbf16>
    %cst_20 = arith.constant dense<0.000000e+00> : vector<16x32xf32>
    %36 = tpu.matmul %33, %35, %cst_20 {dimension_numbers = #tpu.dot_dimension_numbers<[1], [0], [0], [1], [0, 0, 1, 1], [], []>} : vector<16x32xbf16>, vector<32x32xbf16>, vector<16x32xf32> -> vector<16x32xf32>
    %c0_21 = arith.constant 0 : index
    %c0_22 = arith.constant 0 : index
    %c0_23 = arith.constant 0 : index
    %37 = vector.load %arg7[%c0_21, %c0_22, %c0_23] : memref<2x1x32xf32, #tpu.memory_space<vmem>>, vector<1x1x32xf32>
    %38 = vector.shape_cast %37 : vector<1x1x32xf32> to vector<1x32xf32>
    %39 = vector.broadcast %38 : vector<1x32xf32> to vector<16x32xf32>
    %40 = arith.addf %36, %39 : vector<16x32xf32>
    %41 = arith.addf %0, %40 : vector<16x32xf32>
    %c0_24 = arith.constant 0 : index
    %c0_25 = arith.constant 0 : index
    %c0_26 = arith.constant 0 : index
    %42 = vector.load %arg8[%c0_24, %c0_25, %c0_26] : memref<2x1x32xf32, #tpu.memory_space<vmem>>, vector<1x1x32xf32>
    %43 = vector.shape_cast %42 : vector<1x1x32xf32> to vector<1x32xf32>
    %c0_27 = arith.constant 0 : index
    %c0_28 = arith.constant 0 : index
    %c0_29 = arith.constant 0 : index
    %44 = vector.load %arg9[%c0_27, %c0_28, %c0_29] : memref<2x1x32xf32, #tpu.memory_space<vmem>>, vector<1x1x32xf32>
    %45 = vector.shape_cast %44 : vector<1x1x32xf32> to vector<1x32xf32>
    %cst_30 = arith.constant dense<0.000000e+00> : vector<16xf32>
    %46 = vector.multi_reduction <add>, %41, %cst_30 [1] : vector<16x32xf32> to vector<16xf32>
    %47 = vector.shape_cast %46 : vector<16xf32> to vector<16x1xf32>
    %cst_31 = arith.constant 3.200000e+01 : f32
    %48 = vector.broadcast %cst_31 : f32 to vector<16x1xf32>
    %49 = arith.divf %47, %48 : vector<16x1xf32>
    %50 = arith.mulf %41, %41 : vector<16x32xf32>
    %cst_32 = arith.constant dense<0.000000e+00> : vector<16xf32>
    %51 = vector.multi_reduction <add>, %50, %cst_32 [1] : vector<16x32xf32> to vector<16xf32>
    %52 = vector.shape_cast %51 : vector<16xf32> to vector<16x1xf32>
    %cst_33 = arith.constant 3.200000e+01 : f32
    %53 = vector.broadcast %cst_33 : f32 to vector<16x1xf32>
    %54 = arith.divf %52, %53 : vector<16x1xf32>
    %55 = arith.mulf %49, %49 : vector<16x1xf32>
    %56 = arith.subf %54, %55 : vector<16x1xf32>
    %57 = vector.broadcast %49 : vector<16x1xf32> to vector<16x32xf32>
    %58 = arith.subf %41, %57 : vector<16x32xf32>
    %cst_34 = arith.constant 9.99999974E-6 : f32
    %59 = vector.broadcast %cst_34 : f32 to vector<16x1xf32>
    %60 = arith.addf %56, %59 : vector<16x1xf32>
    %61 = math.rsqrt %60 : vector<16x1xf32>
    %62 = vector.broadcast %61 : vector<16x1xf32> to vector<16x32xf32>
    %63 = arith.mulf %58, %62 : vector<16x32xf32>
    %64 = vector.broadcast %43 : vector<1x32xf32> to vector<16x32xf32>
    %65 = arith.mulf %63, %64 : vector<16x32xf32>
    %66 = vector.broadcast %45 : vector<1x32xf32> to vector<16x32xf32>
    %67 = arith.addf %65, %66 : vector<16x32xf32>
    %68 = arith.truncf %67 : vector<16x32xf32> to vector<16x32xbf16>
    %c0_35 = arith.constant 0 : index
    %c0_36 = arith.constant 0 : index
    %c0_37 = arith.constant 0 : index
    %69 = vector.load %arg10[%c0_35, %c0_36, %c0_37] : memref<2x32x64xbf16, #tpu.memory_space<vmem>>, vector<1x32x64xbf16>
    %70 = vector.shape_cast %69 : vector<1x32x64xbf16> to vector<32x64xbf16>
    %cst_38 = arith.constant dense<0.000000e+00> : vector<16x64xf32>
    %71 = tpu.matmul %68, %70, %cst_38 {dimension_numbers = #tpu.dot_dimension_numbers<[1], [0], [0], [1], [0, 0, 1, 1], [], []>} : vector<16x32xbf16>, vector<32x64xbf16>, vector<16x64xf32> -> vector<16x64xf32>
    %c0_39 = arith.constant 0 : index
    %c0_40 = arith.constant 0 : index
    %c0_41 = arith.constant 0 : index
    %72 = vector.load %arg11[%c0_39, %c0_40, %c0_41] : memref<2x1x64xf32, #tpu.memory_space<vmem>>, vector<1x1x64xf32>
    %73 = vector.shape_cast %72 : vector<1x1x64xf32> to vector<1x64xf32>
    %74 = vector.broadcast %73 : vector<1x64xf32> to vector<16x64xf32>
    %75 = arith.addf %71, %74 : vector<16x64xf32>
    %cst_42 = arith.constant 0.000000e+00 : f32
    %76 = vector.broadcast %cst_42 : f32 to vector<16x64xf32>
    %77 = arith.maximumf %75, %76 : vector<16x64xf32>
    %78 = arith.truncf %77 : vector<16x64xf32> to vector<16x64xbf16>
    %c0_43 = arith.constant 0 : index
    %c0_44 = arith.constant 0 : index
    %c0_45 = arith.constant 0 : index
    %79 = vector.load %arg12[%c0_43, %c0_44, %c0_45] : memref<2x64x32xbf16, #tpu.memory_space<vmem>>, vector<1x64x32xbf16>
    %80 = vector.shape_cast %79 : vector<1x64x32xbf16> to vector<64x32xbf16>
    %cst_46 = arith.constant dense<0.000000e+00> : vector<16x32xf32>
    %81 = tpu.matmul %78, %80, %cst_46 {dimension_numbers = #tpu.dot_dimension_numbers<[1], [0], [0], [1], [0, 0, 1, 1], [], []>} : vector<16x64xbf16>, vector<64x32xbf16>, vector<16x32xf32> -> vector<16x32xf32>
    %c0_47 = arith.constant 0 : index
    %c0_48 = arith.constant 0 : index
    %c0_49 = arith.constant 0 : index
    %82 = vector.load %arg13[%c0_47, %c0_48, %c0_49] : memref<2x1x32xf32, #tpu.memory_space<vmem>>, vector<1x1x32xf32>
    %83 = vector.shape_cast %82 : vector<1x1x32xf32> to vector<1x32xf32>
    %84 = vector.broadcast %83 : vector<1x32xf32> to vector<16x32xf32>
    %85 = arith.addf %81, %84 : vector<16x32xf32>
    %86 = arith.addf %67, %85 : vector<16x32xf32>
    %c0_50 = arith.constant 0 : index
    %c0_51 = arith.constant 0 : index
    %c0_52 = arith.constant 0 : index
    %87 = vector.load %arg14[%c0_50, %c0_51, %c0_52] : memref<2x1x32xf32, #tpu.memory_space<vmem>>, vector<1x1x32xf32>
    %88 = vector.shape_cast %87 : vector<1x1x32xf32> to vector<1x32xf32>
    %c0_53 = arith.constant 0 : index
    %c0_54 = arith.constant 0 : index
    %c0_55 = arith.constant 0 : index
    %89 = vector.load %arg15[%c0_53, %c0_54, %c0_55] : memref<2x1x32xf32, #tpu.memory_space<vmem>>, vector<1x1x32xf32>
    %90 = vector.shape_cast %89 : vector<1x1x32xf32> to vector<1x32xf32>
    %cst_56 = arith.constant dense<0.000000e+00> : vector<16xf32>
    %91 = vector.multi_reduction <add>, %86, %cst_56 [1] : vector<16x32xf32> to vector<16xf32>
    %92 = vector.shape_cast %91 : vector<16xf32> to vector<16x1xf32>
    %cst_57 = arith.constant 3.200000e+01 : f32
    %93 = vector.broadcast %cst_57 : f32 to vector<16x1xf32>
    %94 = arith.divf %92, %93 : vector<16x1xf32>
    %95 = arith.mulf %86, %86 : vector<16x32xf32>
    %cst_58 = arith.constant dense<0.000000e+00> : vector<16xf32>
    %96 = vector.multi_reduction <add>, %95, %cst_58 [1] : vector<16x32xf32> to vector<16xf32>
    %97 = vector.shape_cast %96 : vector<16xf32> to vector<16x1xf32>
    %cst_59 = arith.constant 3.200000e+01 : f32
    %98 = vector.broadcast %cst_59 : f32 to vector<16x1xf32>
    %99 = arith.divf %97, %98 : vector<16x1xf32>
    %100 = arith.mulf %94, %94 : vector<16x1xf32>
    %101 = arith.subf %99, %100 : vector<16x1xf32>
    %102 = vector.broadcast %94 : vector<16x1xf32> to vector<16x32xf32>
    %103 = arith.subf %86, %102 : vector<16x32xf32>
    %cst_60 = arith.constant 9.99999974E-6 : f32
    %104 = vector.broadcast %cst_60 : f32 to vector<16x1xf32>
    %105 = arith.addf %101, %104 : vector<16x1xf32>
    %106 = math.rsqrt %105 : vector<16x1xf32>
    %107 = vector.broadcast %106 : vector<16x1xf32> to vector<16x32xf32>
    %108 = arith.mulf %103, %107 : vector<16x32xf32>
    %109 = vector.broadcast %88 : vector<1x32xf32> to vector<16x32xf32>
    %110 = arith.mulf %108, %109 : vector<16x32xf32>
    %111 = vector.broadcast %90 : vector<1x32xf32> to vector<16x32xf32>
    %112 = arith.addf %110, %111 : vector<16x32xf32>
    %113 = arith.truncf %112 : vector<16x32xf32> to vector<16x32xbf16>
    %c1 = arith.constant 1 : index
    %c0_61 = arith.constant 0 : index
    %c0_62 = arith.constant 0 : index
    %114 = vector.load %arg4[%c1, %c0_61, %c0_62] : memref<2x32x96xbf16, #tpu.memory_space<vmem>>, vector<1x32x96xbf16>
    %115 = vector.shape_cast %114 : vector<1x32x96xbf16> to vector<32x96xbf16>
    %cst_63 = arith.constant dense<0.000000e+00> : vector<16x96xf32>
    %116 = tpu.matmul %113, %115, %cst_63 {dimension_numbers = #tpu.dot_dimension_numbers<[1], [0], [0], [1], [0, 0, 1, 1], [], []>} : vector<16x32xbf16>, vector<32x96xbf16>, vector<16x96xf32> -> vector<16x96xf32>
    %c1_64 = arith.constant 1 : index
    %c0_65 = arith.constant 0 : index
    %c0_66 = arith.constant 0 : index
    %117 = vector.load %arg5[%c1_64, %c0_65, %c0_66] : memref<2x1x96xf32, #tpu.memory_space<vmem>>, vector<1x1x96xf32>
    %118 = vector.shape_cast %117 : vector<1x1x96xf32> to vector<1x96xf32>
    %119 = vector.broadcast %118 : vector<1x96xf32> to vector<16x96xf32>
    %120 = arith.addf %116, %119 : vector<16x96xf32>
    %121 = vector.extract_strided_slice %120 {offsets = [0, 0], sizes = [16, 32], strides = [1, 1]} : vector<16x96xf32> to vector<16x32xf32>
    %122 = vector.extract_strided_slice %120 {offsets = [0, 32], sizes = [16, 32], strides = [1, 1]} : vector<16x96xf32> to vector<16x32xf32>
    %123 = vector.extract_strided_slice %120 {offsets = [0, 64], sizes = [16, 32], strides = [1, 1]} : vector<16x96xf32> to vector<16x32xf32>
    %124 = tpu.concatenate %122, %122, %122, %122 in 0 : vector<16x32xf32>, vector<16x32xf32>, vector<16x32xf32>, vector<16x32xf32> -> vector<64x32xf32>
    %125 = arith.mulf %124, %2 : vector<64x32xf32>
    %126 = arith.truncf %125 : vector<64x32xf32> to vector<64x32xbf16>
    %127 = tpu.concatenate %123, %123, %123, %123 in 0 : vector<16x32xf32>, vector<16x32xf32>, vector<16x32xf32>, vector<16x32xf32> -> vector<64x32xf32>
    %128 = arith.mulf %127, %2 : vector<64x32xf32>
    %129 = arith.truncf %128 : vector<64x32xf32> to vector<64x32xbf16>
    %130 = arith.truncf %121 : vector<16x32xf32> to vector<16x32xbf16>
    %cst_67 = arith.constant dense<0.000000e+00> : vector<16x64xf32>
    %131 = tpu.matmul %130, %126, %cst_67 {dimension_numbers = #tpu.dot_dimension_numbers<[1], [1], [0], [0], [0, 0, 1, 0], [], []>} : vector<16x32xbf16>, vector<64x32xbf16>, vector<16x64xf32> -> vector<16x64xf32>
    %132 = arith.addf %131, %1 : vector<16x64xf32>
    %cst_68 = arith.constant dense<0xFF800000> : vector<16xf32>
    %133 = vector.multi_reduction <maximumf>, %132, %cst_68 [1] : vector<16x64xf32> to vector<16xf32>
    %134 = vector.shape_cast %133 : vector<16xf32> to vector<16x1xf32>
    %135 = vector.broadcast %134 : vector<16x1xf32> to vector<16x64xf32>
    %136 = arith.subf %132, %135 : vector<16x64xf32>
    %137 = math.exp %136 : vector<16x64xf32>
    %cst_69 = arith.constant dense<0.000000e+00> : vector<16x64xf32>
    %138 = tpu.matmul %137, %3, %cst_69 {dimension_numbers = #tpu.dot_dimension_numbers<[1], [0], [0], [1], [0, 0, 1, 1], [], []>} : vector<16x64xf32>, vector<64x64xf32>, vector<16x64xf32> -> vector<16x64xf32>
    %139 = arith.divf %137, %138 : vector<16x64xf32>
    %140 = arith.truncf %139 : vector<16x64xf32> to vector<16x64xbf16>
    %cst_70 = arith.constant dense<0.000000e+00> : vector<16x32xf32>
    %141 = tpu.matmul %140, %129, %cst_70 {dimension_numbers = #tpu.dot_dimension_numbers<[1], [0], [0], [1], [0, 0, 1, 1], [], []>} : vector<16x64xbf16>, vector<64x32xbf16>, vector<16x32xf32> -> vector<16x32xf32>
    %142 = arith.truncf %141 : vector<16x32xf32> to vector<16x32xbf16>
    %c1_71 = arith.constant 1 : index
    %c0_72 = arith.constant 0 : index
    %c0_73 = arith.constant 0 : index
    %143 = vector.load %arg6[%c1_71, %c0_72, %c0_73] : memref<2x32x32xbf16, #tpu.memory_space<vmem>>, vector<1x32x32xbf16>
    %144 = vector.shape_cast %143 : vector<1x32x32xbf16> to vector<32x32xbf16>
    %cst_74 = arith.constant dense<0.000000e+00> : vector<16x32xf32>
    %145 = tpu.matmul %142, %144, %cst_74 {dimension_numbers = #tpu.dot_dimension_numbers<[1], [0], [0], [1], [0, 0, 1, 1], [], []>} : vector<16x32xbf16>, vector<32x32xbf16>, vector<16x32xf32> -> vector<16x32xf32>
    %c1_75 = arith.constant 1 : index
    %c0_76 = arith.constant 0 : index
    %c0_77 = arith.constant 0 : index
    %146 = vector.load %arg7[%c1_75, %c0_76, %c0_77] : memref<2x1x32xf32, #tpu.memory_space<vmem>>, vector<1x1x32xf32>
    %147 = vector.shape_cast %146 : vector<1x1x32xf32> to vector<1x32xf32>
    %148 = vector.broadcast %147 : vector<1x32xf32> to vector<16x32xf32>
    %149 = arith.addf %145, %148 : vector<16x32xf32>
    %150 = arith.addf %112, %149 : vector<16x32xf32>
    %c1_78 = arith.constant 1 : index
    %c0_79 = arith.constant 0 : index
    %c0_80 = arith.constant 0 : index
    %151 = vector.load %arg8[%c1_78, %c0_79, %c0_80] : memref<2x1x32xf32, #tpu.memory_space<vmem>>, vector<1x1x32xf32>
    %152 = vector.shape_cast %151 : vector<1x1x32xf32> to vector<1x32xf32>
    %c1_81 = arith.constant 1 : index
    %c0_82 = arith.constant 0 : index
    %c0_83 = arith.constant 0 : index
    %153 = vector.load %arg9[%c1_81, %c0_82, %c0_83] : memref<2x1x32xf32, #tpu.memory_space<vmem>>, vector<1x1x32xf32>
    %154 = vector.shape_cast %153 : vector<1x1x32xf32> to vector<1x32xf32>
    %cst_84 = arith.constant dense<0.000000e+00> : vector<16xf32>
    %155 = vector.multi_reduction <add>, %150, %cst_84 [1] : vector<16x32xf32> to vector<16xf32>
    %156 = vector.shape_cast %155 : vector<16xf32> to vector<16x1xf32>
    %cst_85 = arith.constant 3.200000e+01 : f32
    %157 = vector.broadcast %cst_85 : f32 to vector<16x1xf32>
    %158 = arith.divf %156, %157 : vector<16x1xf32>
    %159 = arith.mulf %150, %150 : vector<16x32xf32>
    %cst_86 = arith.constant dense<0.000000e+00> : vector<16xf32>
    %160 = vector.multi_reduction <add>, %159, %cst_86 [1] : vector<16x32xf32> to vector<16xf32>
    %161 = vector.shape_cast %160 : vector<16xf32> to vector<16x1xf32>
    %cst_87 = arith.constant 3.200000e+01 : f32
    %162 = vector.broadcast %cst_87 : f32 to vector<16x1xf32>
    %163 = arith.divf %161, %162 : vector<16x1xf32>
    %164 = arith.mulf %158, %158 : vector<16x1xf32>
    %165 = arith.subf %163, %164 : vector<16x1xf32>
    %166 = vector.broadcast %158 : vector<16x1xf32> to vector<16x32xf32>
    %167 = arith.subf %150, %166 : vector<16x32xf32>
    %cst_88 = arith.constant 9.99999974E-6 : f32
    %168 = vector.broadcast %cst_88 : f32 to vector<16x1xf32>
    %169 = arith.addf %165, %168 : vector<16x1xf32>
    %170 = math.rsqrt %169 : vector<16x1xf32>
    %171 = vector.broadcast %170 : vector<16x1xf32> to vector<16x32xf32>
    %172 = arith.mulf %167, %171 : vector<16x32xf32>
    %173 = vector.broadcast %152 : vector<1x32xf32> to vector<16x32xf32>
    %174 = arith.mulf %172, %173 : vector<16x32xf32>
    %175 = vector.broadcast %154 : vector<1x32xf32> to vector<16x32xf32>
    %176 = arith.addf %174, %175 : vector<16x32xf32>
    %177 = arith.truncf %176 : vector<16x32xf32> to vector<16x32xbf16>
    %c1_89 = arith.constant 1 : index
    %c0_90 = arith.constant 0 : index
    %c0_91 = arith.constant 0 : index
    %178 = vector.load %arg10[%c1_89, %c0_90, %c0_91] : memref<2x32x64xbf16, #tpu.memory_space<vmem>>, vector<1x32x64xbf16>
    %179 = vector.shape_cast %178 : vector<1x32x64xbf16> to vector<32x64xbf16>
    %cst_92 = arith.constant dense<0.000000e+00> : vector<16x64xf32>
    %180 = tpu.matmul %177, %179, %cst_92 {dimension_numbers = #tpu.dot_dimension_numbers<[1], [0], [0], [1], [0, 0, 1, 1], [], []>} : vector<16x32xbf16>, vector<32x64xbf16>, vector<16x64xf32> -> vector<16x64xf32>
    %c1_93 = arith.constant 1 : index
    %c0_94 = arith.constant 0 : index
    %c0_95 = arith.constant 0 : index
    %181 = vector.load %arg11[%c1_93, %c0_94, %c0_95] : memref<2x1x64xf32, #tpu.memory_space<vmem>>, vector<1x1x64xf32>
    %182 = vector.shape_cast %181 : vector<1x1x64xf32> to vector<1x64xf32>
    %183 = vector.broadcast %182 : vector<1x64xf32> to vector<16x64xf32>
    %184 = arith.addf %180, %183 : vector<16x64xf32>
    %cst_96 = arith.constant 0.000000e+00 : f32
    %185 = vector.broadcast %cst_96 : f32 to vector<16x64xf32>
    %186 = arith.maximumf %184, %185 : vector<16x64xf32>
    %187 = arith.truncf %186 : vector<16x64xf32> to vector<16x64xbf16>
    %c1_97 = arith.constant 1 : index
    %c0_98 = arith.constant 0 : index
    %c0_99 = arith.constant 0 : index
    %188 = vector.load %arg12[%c1_97, %c0_98, %c0_99] : memref<2x64x32xbf16, #tpu.memory_space<vmem>>, vector<1x64x32xbf16>
    %189 = vector.shape_cast %188 : vector<1x64x32xbf16> to vector<64x32xbf16>
    %cst_100 = arith.constant dense<0.000000e+00> : vector<16x32xf32>
    %190 = tpu.matmul %187, %189, %cst_100 {dimension_numbers = #tpu.dot_dimension_numbers<[1], [0], [0], [1], [0, 0, 1, 1], [], []>} : vector<16x64xbf16>, vector<64x32xbf16>, vector<16x32xf32> -> vector<16x32xf32>
    %c1_101 = arith.constant 1 : index
    %c0_102 = arith.constant 0 : index
    %c0_103 = arith.constant 0 : index
    %191 = vector.load %arg13[%c1_101, %c0_102, %c0_103] : memref<2x1x32xf32, #tpu.memory_space<vmem>>, vector<1x1x32xf32>
    %192 = vector.shape_cast %191 : vector<1x1x32xf32> to vector<1x32xf32>
    %193 = vector.broadcast %192 : vector<1x32xf32> to vector<16x32xf32>
    %194 = arith.addf %190, %193 : vector<16x32xf32>
    %195 = arith.addf %176, %194 : vector<16x32xf32>
    %c1_104 = arith.constant 1 : index
    %c0_105 = arith.constant 0 : index
    %c0_106 = arith.constant 0 : index
    %196 = vector.load %arg14[%c1_104, %c0_105, %c0_106] : memref<2x1x32xf32, #tpu.memory_space<vmem>>, vector<1x1x32xf32>
    %197 = vector.shape_cast %196 : vector<1x1x32xf32> to vector<1x32xf32>
    %c1_107 = arith.constant 1 : index
    %c0_108 = arith.constant 0 : index
    %c0_109 = arith.constant 0 : index
    %198 = vector.load %arg15[%c1_107, %c0_108, %c0_109] : memref<2x1x32xf32, #tpu.memory_space<vmem>>, vector<1x1x32xf32>
    %199 = vector.shape_cast %198 : vector<1x1x32xf32> to vector<1x32xf32>
    %cst_110 = arith.constant dense<0.000000e+00> : vector<16xf32>
    %200 = vector.multi_reduction <add>, %195, %cst_110 [1] : vector<16x32xf32> to vector<16xf32>
    %201 = vector.shape_cast %200 : vector<16xf32> to vector<16x1xf32>
    %cst_111 = arith.constant 3.200000e+01 : f32
    %202 = vector.broadcast %cst_111 : f32 to vector<16x1xf32>
    %203 = arith.divf %201, %202 : vector<16x1xf32>
    %204 = arith.mulf %195, %195 : vector<16x32xf32>
    %cst_112 = arith.constant dense<0.000000e+00> : vector<16xf32>
    %205 = vector.multi_reduction <add>, %204, %cst_112 [1] : vector<16x32xf32> to vector<16xf32>
    %206 = vector.shape_cast %205 : vector<16xf32> to vector<16x1xf32>
    %cst_113 = arith.constant 3.200000e+01 : f32
    %207 = vector.broadcast %cst_113 : f32 to vector<16x1xf32>
    %208 = arith.divf %206, %207 : vector<16x1xf32>
    %209 = arith.mulf %203, %203 : vector<16x1xf32>
    %210 = arith.subf %208, %209 : vector<16x1xf32>
    %211 = vector.broadcast %203 : vector<16x1xf32> to vector<16x32xf32>
    %212 = arith.subf %195, %211 : vector<16x32xf32>
    %cst_114 = arith.constant 9.99999974E-6 : f32
    %213 = vector.broadcast %cst_114 : f32 to vector<16x1xf32>
    %214 = arith.addf %210, %213 : vector<16x1xf32>
    %215 = math.rsqrt %214 : vector<16x1xf32>
    %216 = vector.broadcast %215 : vector<16x1xf32> to vector<16x32xf32>
    %217 = arith.mulf %212, %216 : vector<16x32xf32>
    %218 = vector.broadcast %197 : vector<1x32xf32> to vector<16x32xf32>
    %219 = arith.mulf %217, %218 : vector<16x32xf32>
    %220 = vector.broadcast %199 : vector<1x32xf32> to vector<16x32xf32>
    %221 = arith.addf %219, %220 : vector<16x32xf32>
    %c0_115 = arith.constant 0 : index
    %c0_116 = arith.constant 0 : index
    %222 = vector.load %arg16[%c0_115, %c0_116] : memref<16x32xf32, #tpu.memory_space<vmem>>, vector<16x32xf32>
    tpu.vector_store %arg16[%c0_115, %c0_116], %221 {strides = array<i32>} : memref<16x32xf32, #tpu.memory_space<vmem>>, vector<16x32xf32>,
    %223 = tpu.concatenate %30, %139 in 1 : vector<16x64xf32>, vector<16x64xf32> -> vector<16x128xf32>
    %c0_117 = arith.constant 0 : index
    %c0_118 = arith.constant 0 : index
    %224 = vector.load %arg17[%c0_117, %c0_118] : memref<16x128xf32, #tpu.memory_space<vmem>>, vector<16x128xf32>
    tpu.vector_store %arg17[%c0_117, %c0_118], %223 {strides = array<i32>} : memref<16x128xf32, #tpu.memory_space<vmem>>, vector<16x128xf32>,
    return
  }
}

</mosaic_0001>

<llo_original>
// kernel: tpu_custom_call.1
$region0: #{tpu_custom_call.1}
  #allocation0 [shape = 'u32[]', space=smem, size = 0x4, offset = 0x4, fixed_abs, tag = 'smem constant byte address 0x4 - core index']
  #allocation1 [shape = 'u32[144,128]{1,0:T(1,128)}', space=vmem, size = 0x12000, scoped, tag = 'internal scratch']
  %s0 = inlined_call_operand.hbm [shape: f32[16,32], index: 0, kind: input, shape index: {}]
  %s1 = inlined_call_operand.hbm [shape: f32[16,64], index: 1, kind: input, shape index: {}]
  %s2 = inlined_call_operand.vmem [shape: f32[64,32], index: 2, kind: input, shape index: {}]
  %s3 = inlined_call_operand.vmem [shape: f32[64,64], index: 3, kind: input, shape index: {}]
  %s4 = inlined_call_operand.vmem [shape: bf16[2,32,96], index: 4, kind: input, shape index: {}]
  %s5 = inlined_call_operand.vmem [shape: f32[2,1,96], index: 5, kind: input, shape index: {}]
  %s6 = inlined_call_operand.vmem [shape: bf16[2,32,32], index: 6, kind: input, shape index: {}]
  %s7 = inlined_call_operand.vmem [shape: f32[2,1,32], index: 7, kind: input, shape index: {}]
  %s8 = inlined_call_operand.vmem [shape: f32[2,1,32], index: 8, kind: input, shape index: {}]
  %s9 = inlined_call_operand.vmem [shape: f32[2,1,32], index: 9, kind: input, shape index: {}]
  %s10 = inlined_call_operand.vmem [shape: bf16[2,32,64], index: 10, kind: input, shape index: {}]
  %s11 = inlined_call_operand.vmem [shape: f32[2,1,64], index: 11, kind: input, shape index: {}]
  %s12 = inlined_call_operand.vmem [shape: bf16[2,64,32], index: 12, kind: input, shape index: {}]
  %s13 = inlined_call_operand.vmem [shape: f32[2,1,32], index: 13, kind: input, shape index: {}]
  %s14 = inlined_call_operand.vmem [shape: f32[2,1,32], index: 14, kind: input, shape index: {}]
  %s15 = inlined_call_operand.vmem [shape: f32[2,1,32], index: 15, kind: input, shape index: {}]
  %s16 = inlined_call_operand.hbm [shape: f32[16,32], index: 16, kind: output, shape index: {0}]
  %s17 = inlined_call_operand.hbm [shape: f32[16,128], index: 17, kind: output, shape index: {1}]
  %18 = xla_tuple %s16, %s17
  %s19 = sld [smem:[#allocation0]]
  $region90: #{tpu_custom_call.1} parent=0
    _
  %s21 = ssub.s32 1, %s19
  %s22 = scalar_select 0, %s21, %s19
  $region1: #{tpu_custom_call.1} parent=0
    #allocation2 [shape = 'u8[8192]{0}', space=vmem, size = 0x2000, scoped, tag = 'input window, operand 0, single buffered']
    #allocation3 [shape = 's32[1]{0}', space=sflag, size = 0x4, scoped, tag = 'scoped memory for tpu_custom_call.1']
    #allocation4 [shape = 's32[1]{0}', space=sflag, size = 0x4, scoped, tag = 'scoped memory for tpu_custom_call.1']
    #allocation5 [shape = 'u8[8192]{0}', space=vmem, size = 0x2000, scoped, tag = 'input window, operand 1, single buffered']
    #allocation6 [shape = 's32[1]{0}', space=sflag, size = 0x4, scoped, tag = 'scoped memory for tpu_custom_call.1']
    #allocation7 [shape = 'u8[8192]{0}', space=vmem, size = 0x2000, scoped, tag = 'output window, operand 0, single buffered']
    #allocation8 [shape = 'u8[8192]{0}', space=vmem, size = 0x2000, scoped, tag = 'output window, operand 1, single buffered']
    #allocation9 [shape = 's32[1]{0}', space=sflag, size = 0x4, scoped, tag = 'scoped memory for tpu_custom_call.1']
    %23 = vsyncpa [#allocation3], 0
    %24 = vsyncpa [#allocation6], 0
    %25 = vsyncpa [#allocation4], 0
    %26 = vsyncpa [#allocation9], 0
    // Predicated region
    $region2: #{tpu_custom_call.1} parent=1 // pred_check
      _
    $region3: #{tpu_custom_call.1} parent=1 // pred_check_branch
      %28 = sbr.rel (0) target = $region5
    $region4: #{tpu_custom_call.1} parent=1 // pred_region
      %s30 = ssub.s32 256, 256
      %31 = vsyncadd [#allocation3], %s30
      %s32 = sshll.u32 [#allocation2], 4
      %s33 = int_to_ptr.vmem [resolvable:$true] %s32
      %38 = dma.hbm_to_vmem [thread:$0]  %s0, 256, %s33, [#allocation3], 128, 128, 8
    $region5: #{tpu_custom_call.1} parent=1 // pred_fallthru
      _
    // Predicated region
    $region6: #{tpu_custom_call.1} parent=1 // pred_check
      _
    $region7: #{tpu_custom_call.1} parent=1 // pred_check_branch
      %40 = sbr.rel (0) target = $region9
    $region8: #{tpu_custom_call.1} parent=1 // pred_region
      %s42 = ssub.s32 256, 256
      %43 = vsyncadd [#allocation6], %s42
      %s44 = sshll.u32 [#allocation5], 4
      %s45 = int_to_ptr.vmem [resolvable:$true] %s44
      %50 = dma.hbm_to_vmem [thread:$0]  %s1, 256, %s45, [#allocation6], 128, 128, 8
    $region9: #{tpu_custom_call.1} parent=1 // pred_fallthru
      _
    // Predicated region
    $region10: #{tpu_custom_call.1} parent=1 // pred_check
      _
    $region11: #{tpu_custom_call.1} parent=1 // pred_check_branch
      %52 = sbr.rel (0) target = $region13
    $region12: #{tpu_custom_call.1} parent=1 // pred_region
      _
    $region13: #{tpu_custom_call.1} parent=1 // pred_fallthru
      _
    // Predicated region
    $region14: #{tpu_custom_call.1} parent=1 // pred_check
      _
    $region15: #{tpu_custom_call.1} parent=1 // pred_check_branch
      %54 = sbr.rel (0) target = $region17
    $region16: #{tpu_custom_call.1} parent=1 // pred_region
      _
    $region17: #{tpu_custom_call.1} parent=1 // pred_fallthru
      _
    // Predicated region
    $region18: #{tpu_custom_call.1} parent=1 // pred_check
      _
    $region19: #{tpu_custom_call.1} parent=1 // pred_check_branch
      %56 = sbr.rel (0) target = $region21
    $region20: #{tpu_custom_call.1} parent=1 // pred_region
      _
    $region21: #{tpu_custom_call.1} parent=1 // pred_fallthru
      _
    // Predicated region
    $region22: #{tpu_custom_call.1} parent=1 // pred_check
      _
    $region23: #{tpu_custom_call.1} parent=1 // pred_check_branch
      %58 = sbr.rel (0) target = $region25
    $region24: #{tpu_custom_call.1} parent=1 // pred_region
      _
    $region25: #{tpu_custom_call.1} parent=1 // pred_fallthru
      _
    // Predicated region
    $region26: #{tpu_custom_call.1} parent=1 // pred_check
      _
    $region27: #{tpu_custom_call.1} parent=1 // pred_check_branch
      %60 = sbr.rel (0) target = $region29
    $region28: #{tpu_custom_call.1} parent=1 // pred_region
      _
    $region29: #{tpu_custom_call.1} parent=1 // pred_fallthru
      _
    // Predicated region
    $region30: #{tpu_custom_call.1} parent=1 // pred_check
      _
    $region31: #{tpu_custom_call.1} parent=1 // pred_check_branch
      %62 = sbr.rel (0) target = $region33
    $region32: #{tpu_custom_call.1} parent=1 // pred_region
      _
    $region33: #{tpu_custom_call.1} parent=1 // pred_fallthru
      _
    // Predicated region
    $region34: #{tpu_custom_call.1} parent=1 // pred_check
      _
    $region35: #{tpu_custom_call.1} parent=1 // pred_check_branch
      %64 = sbr.rel (0) target = $region37
    $region36: #{tpu_custom_call.1} parent=1 // pred_region
      _
    $region37: #{tpu_custom_call.1} parent=1 // pred_fallthru
      _
    // Predicated region
    $region38: #{tpu_custom_call.1} parent=1 // pred_check
      _
    $region39: #{tpu_custom_call.1} parent=1 // pred_check_branch
      %66 = sbr.rel (0) target = $region41
    $region40: #{tpu_custom_call.1} parent=1 // pred_region
      _
    $region41: #{tpu_custom_call.1} parent=1 // pred_fallthru
      _
    // Predicated region
    $region42: #{tpu_custom_call.1} parent=1 // pred_check
      _
    $region43: #{tpu_custom_call.1} parent=1 // pred_check_branch
      %68 = sbr.rel (0) target = $region45
    $region44: #{tpu_custom_call.1} parent=1 // pred_region
      _
    $region45: #{tpu_custom_call.1} parent=1 // pred_fallthru
      _
    // Predicated region
    $region46: #{tpu_custom_call.1} parent=1 // pred_check
      _
    $region47: #{tpu_custom_call.1} parent=1 // pred_check_branch
      %70 = sbr.rel (0) target = $region49
    $region48: #{tpu_custom_call.1} parent=1 // pred_region
      _
    $region49: #{tpu_custom_call.1} parent=1 // pred_fallthru
      _
    // Predicated region
    $region50: #{tpu_custom_call.1} parent=1 // pred_check
      _
    $region51: #{tpu_custom_call.1} parent=1 // pred_check_branch
      %72 = sbr.rel (0) target = $region53
    $region52: #{tpu_custom_call.1} parent=1 // pred_region
      _
    $region53: #{tpu_custom_call.1} parent=1 // pred_fallthru
      _
    // Predicated region
    $region54: #{tpu_custom_call.1} parent=1 // pred_check
      _
    $region55: #{tpu_custom_call.1} parent=1 // pred_check_branch
      %74 = sbr.rel (0) target = $region57
    $region56: #{tpu_custom_call.1} parent=1 // pred_region
      _
    $region57: #{tpu_custom_call.1} parent=1 // pred_fallthru
      _
    // Predicated region
    $region58: #{tpu_custom_call.1} parent=1 // pred_check
      _
    $region59: #{tpu_custom_call.1} parent=1 // pred_check_branch
      %76 = sbr.rel (0) target = $region61
    $region60: #{tpu_custom_call.1} parent=1 // pred_region
      _
    $region61: #{tpu_custom_call.1} parent=1 // pred_fallthru
      _
    // Predicated region
    $region62: #{tpu_custom_call.1} parent=1 // pred_check
      _
    $region63: #{tpu_custom_call.1} parent=1 // pred_check_branch
      %78 = sbr.rel (0) target = $region65
    $region64: #{tpu_custom_call.1} parent=1 // pred_region
      _
    $region65: #{tpu_custom_call.1} parent=1 // pred_fallthru
      _
    // Predicated region
    $region66: #{tpu_custom_call.1} parent=1 // pred_check
      _
    $region67: #{tpu_custom_call.1} parent=1 // pred_check_branch
      %80 = sbr.rel (0) target = $region69
    $region68: #{tpu_custom_call.1} parent=1 // pred_region
      %81 = dma.done [#allocation3], 256
    $region69: #{tpu_custom_call.1} parent=1 // pred_fallthru
      _
    // Predicated region
    $region70: #{tpu_custom_call.1} parent=1 // pred_check
      _
    $region71: #{tpu_custom_call.1} parent=1 // pred_check_branch
      %83 = sbr.rel (0) target = $region73
    $region72: #{tpu_custom_call.1} parent=1 // pred_region
      %84 = dma.done [#allocation6], 256
    $region73: #{tpu_custom_call.1} parent=1 // pred_fallthru
      _
    %v86 = vld [vmem:[#allocation2] sm:$0xff]
    %v87 = vld [vmem:[#allocation2 + $0x8] sm:$0xff]
    %v88 = vld [vmem:[#allocation5] sm:$0xff]
    %v89 = vld [vmem:[#allocation5 + $0x8] sm:$0xff]
    %v90 = vld [vmem:[%s2] sm:$0xff]
    %v91 = vld [vmem:[%s2 + $0x8] sm:$0xff]
    %v92 = vld [vmem:[%s2 + $0x10] sm:$0xff]
    %v93 = vld [vmem:[%s2 + $0x18] sm:$0xff]
    %v94 = vld [vmem:[%s2 + $0x20] sm:$0xff]
    %v95 = vld [vmem:[%s2 + $0x28] sm:$0xff]
    %v96 = vld [vmem:[%s2 + $0x30] sm:$0xff]
    %v97 = vld [vmem:[%s2 + $0x38] sm:$0xff]
    %v98 = vld [vmem:[%s3] sm:$0xff]
    %v99 = vld [vmem:[%s3 + $0x8] sm:$0xff]
    %v100 = vld [vmem:[%s3 + $0x10] sm:$0xff]
    %v101 = vld [vmem:[%s3 + $0x18] sm:$0xff]
    %v102 = vld [vmem:[%s3 + $0x20] sm:$0xff]
    %v103 = vld [vmem:[%s3 + $0x28] sm:$0xff]
    %v104 = vld [vmem:[%s3 + $0x30] sm:$0xff]
    %v105 = vld [vmem:[%s3 + $0x38] sm:$0xff]
    %v106 = vpack.c.bf16 %v87, %v86
    %v107 = vld [vmem:[%s4] sm:$0xf]
    %v108 = vld [vmem:[%s4 + $0x4] sm:$0xf]
    %v109 = vld [vmem:[%s4 + $0x8] sm:$0xf]
    %v110 = vld [vmem:[%s4 + $0xc] sm:$0xf]
    %v111 = vld [vmem:[%s5] sm:$0x1]
    %v113 = vlaneseq
    %v114 = vshrl.u32 %v113, 7
    %v115 = vsub.s32 0, %v114
    %v116 = vrot.slane %v111, %v115
    %v122 = vunpack.c.l.b16 %v107
    %v123 = vunpack.c.l.b16 %v108
    %v124 = vunpack.c.l.b16 %v109
    %v125 = vunpack.c.l.b16 %v110
    %v126 = vpack.c.b16 %v123, %v122
    %v127 = vpack.c.b16 %v125, %v124
    %vm130 = vcmask 261120
    %v132 = vsel %vm130, %v106, 0
    %134 = vmatprep.subr.bf16.mxu0 0
    %135 = vmatpush1.bf16.msra.mxu0 %v126
    %136 = vmatprep.subr.bf16.mxu0 0
    %137 = vmatpush1.bf16.msra.mxu0 %v127
    %138 = vmatprep.subr.bf16.mxu0 0
    %139 = vmatpush1.bf16.msra.mxu0 0
    %140 = vmatprep.subr.bf16.mxu0 0
    %141 = vmatpush1.bf16.msra.mxu0 0
    %142 = vmatprep.subr.bf16.mxu0 0
    %143 = vmatpush1.bf16.msra.mxu0 0
    %144 = vmatprep.subr.bf16.mxu0 0
    %145 = vmatpush1.bf16.msra.mxu0 0
    %146 = vmatprep.subr.bf16.mxu0 0
    %147 = vmatpush1.bf16.msra.mxu0 0
    %148 = vmatprep.subr.bf16.mxu0 0
    %149 = vmatpush1.bf16.msra.mxu0 0
    %150 = vmatprep.subr.bf16.mxu0 0
    %151 = vmatpush1.bf16.msra.mxu0 0
    %152 = vmatprep.subr.bf16.mxu0 0
    %153 = vmatpush1.bf16.msra.mxu0 0
    %154 = vmatprep.subr.bf16.mxu0 0
    %155 = vmatpush1.bf16.msra.mxu0 0
    %156 = vmatprep.subr.bf16.mxu0 0
    %157 = vmatpush1.bf16.msra.mxu0 0
    %158 = vmatprep.subr.bf16.mxu0 0
    %159 = vmatpush1.bf16.msra.mxu0 0
    %160 = vmatprep.subr.bf16.mxu0 0
    %161 = vmatpush1.bf16.msra.mxu0 0
    %162 = vmatprep.subr.bf16.mxu0 0
    %163 = vmatpush1.bf16.msra.mxu0 0
    %164 = vmatprep.subr.bf16.mxu0 0
    %165 = vmatpush1.bf16.msra.mxu0 0
    %166 = vmatprep.mubr.bf16.mxu0 0
    %167 = vmatmul.mubr.bf16.gmra.mrb[0].mxu0 %v132
    %v168 = vpop.f32.mrb[0].mxu0
    %v169 = vadd.f32 %v116, %v168
    %v170 = vpop.f32.mrb[0].mxu0
    %v171 = vpop.f32.mrb[0].mxu0
    %v172 = vadd.f32 %v116, %v171
    %v173 = vpop.f32.mrb[0].mxu0
    %174 = vdwg.mxu0
    %183 = vrot.lane.b32.xlu0 %v90, 32
    %v184 = vpop.permute.xlu0 %183
    %185 = vrot.lane.b32.xlu0 %v91, 32
    %v186 = vpop.permute.xlu0 %185
    %187 = vrot.lane.b32.xlu0 %v92, 32
    %v188 = vpop.permute.xlu0 %187
    %189 = vrot.lane.b32.xlu0 %v93, 32
    %v190 = vpop.permute.xlu0 %189
    %191 = vrot.lane.b32.xlu0 %v94, 32
    %v192 = vpop.permute.xlu0 %191
    %193 = vrot.lane.b32.xlu0 %v95, 32
    %v194 = vpop.permute.xlu0 %193
    %195 = vrot.lane.b32.xlu0 %v96, 32
    %v196 = vpop.permute.xlu0 %195
    %197 = vrot.lane.b32.xlu0 %v97, 32
    %v198 = vpop.permute.xlu0 %197
    %v207 = vmul.f32 %v169, %v184
    %v208 = vmul.f32 %v172, %v186
    %v209 = vmul.f32 %v169, %v188
    %v210 = vmul.f32 %v172, %v190
    %v211 = vmul.f32 %v169, %v192
    %v212 = vmul.f32 %v172, %v194
    %v213 = vmul.f32 %v169, %v196
    %v214 = vmul.f32 %v172, %v198
    %v215 = vpack.c.bf16 %v208, %v207
    %v216 = vpack.c.bf16 %v210, %v209
    %v217 = vpack.c.bf16 %v212, %v211
    %v218 = vpack.c.bf16 %v214, %v213
    %219 = vrot.lane.b32.xlu0 %v90, 64
    %v220 = vpop.permute.xlu0 %219
    %221 = vrot.lane.b32.xlu0 %v91, 64
    %v222 = vpop.permute.xlu0 %221
    %223 = vrot.lane.b32.xlu0 %v92, 64
    %v224 = vpop.permute.xlu0 %223
    %225 = vrot.lane.b32.xlu0 %v93, 64
    %v226 = vpop.permute.xlu0 %225
    %227 = vrot.lane.b32.xlu0 %v94, 64
    %v228 = vpop.permute.xlu0 %227
    %229 = vrot.lane.b32.xlu0 %v95, 64
    %v230 = vpop.permute.xlu0 %229
    %231 = vrot.lane.b32.xlu0 %v96, 64
    %v232 = vpop.permute.xlu0 %231
    %233 = vrot.lane.b32.xlu0 %v97, 64
    %v234 = vpop.permute.xlu0 %233
    %v243 = vmul.f32 %v169, %v220
    %v244 = vmul.f32 %v172, %v222
    %v245 = vmul.f32 %v169, %v224
    %v246 = vmul.f32 %v172, %v226
    %v247 = vmul.f32 %v169, %v228
    %v248 = vmul.f32 %v172, %v230
    %v249 = vmul.f32 %v169, %v232
    %v250 = vmul.f32 %v172, %v234
    %v251 = vpack.c.bf16 %v244, %v243
    %v252 = vpack.c.bf16 %v246, %v245
    %v253 = vpack.c.bf16 %v248, %v247
    %v254 = vpack.c.bf16 %v250, %v249
    %v255 = vpack.c.bf16 %v172, %v169
    %260 = vrot.lane.b32.xlu0 %v215, 96
    %v261 = vpop.permute.xlu0 %260
    %262 = vrot.lane.b32.xlu0 %v216, 96
    %v263 = vpop.permute.xlu0 %262
    %264 = vrot.lane.b32.xlu0 %v217, 96
    %v265 = vpop.permute.xlu0 %264
    %266 = vrot.lane.b32.xlu0 %v218, 96
    %v267 = vpop.permute.xlu0 %266
    %v269 = vsel %vm130, %v255, 0
    %v272 = vsel %vm130, %v261, 0
    %v275 = vsel %vm130, %v263, 0
    %v278 = vsel %vm130, %v265, 0
    %v281 = vsel %vm130, %v267, 0
    %283 = vmatprep.subr.bf16.mxu0 0
    %284 = vmatpush1.bf16.xpose.msra.mxu0 %v272
    %285 = vmatprep.subr.bf16.mxu0 0
    %286 = vmatpush1.bf16.xpose.msra.mxu0 %v275
    %287 = vmatprep.subr.bf16.mxu0 0
    %288 = vmatpush1.bf16.xpose.msra.mxu0 %v278
    %289 = vmatprep.subr.bf16.mxu0 0
    %290 = vmatpush1.bf16.xpose.msra.mxu0 %v281
    %291 = vmatprep.subr.bf16.mxu0 0
    %292 = vmatpush1.bf16.xpose.msra.mxu0 0
    %293 = vmatprep.subr.bf16.mxu0 0
    %294 = vmatpush1.bf16.xpose.msra.mxu0 0
    %295 = vmatprep.subr.bf16.mxu0 0
    %296 = vmatpush1.bf16.xpose.msra.mxu0 0
    %297 = vmatprep.subr.bf16.mxu0 0
    %298 = vmatpush1.bf16.xpose.msra.mxu0 0
    %299 = vmatprep.subr.bf16.mxu0 0
    %300 = vmatpush1.bf16.xpose.msra.mxu0 0
    %301 = vmatprep.subr.bf16.mxu0 0
    %302 = vmatpush1.bf16.xpose.msra.mxu0 0
    %303 = vmatprep.subr.bf16.mxu0 0
    %304 = vmatpush1.bf16.xpose.msra.mxu0 0
    %305 = vmatprep.subr.bf16.mxu0 0
    %306 = vmatpush1.bf16.xpose.msra.mxu0 0
    %307 = vmatprep.subr.bf16.mxu0 0
    %308 = vmatpush1.bf16.xpose.msra.mxu0 0
    %309 = vmatprep.subr.bf16.mxu0 0
    %310 = vmatpush1.bf16.xpose.msra.mxu0 0
    %311 = vmatprep.subr.bf16.mxu0 0
    %312 = vmatpush1.bf16.xpose.msra.mxu0 0
    %313 = vmatprep.subr.bf16.mxu0 0
    %314 = vmatpush1.bf16.xpose.msra.mxu0 0
    %315 = vmatprep.mubr.bf16.mxu0 0
    %316 = vmatmul.mubr.bf16.gmra.mrb[0].mxu0 %v269
    %v317 = vpop.f32.mrb[0].mxu0
    %v318 = vadd.f32 %v88, %v317
    %v319 = vpop.f32.mrb[0].mxu0
    %v320 = vpop.f32.mrb[0].mxu0
    %v321 = vadd.f32 %v89, %v320
    %v322 = vpop.f32.mrb[0].mxu0
    %323 = vdwg.mxu0
    %vm324 = vcmask 523264
    %v325 = vsel %vm324, %v318, -inf
    %326 = vmax.xlane.f32.xlu0 %v325
    %v327 = vpop.xlane.xlu0 %326
    %v328 = vsel %vm324, %v321, -inf
    %329 = vmax.xlane.f32.xlu0 %v328
    %v330 = vpop.xlane.xlu0 %329
    %v331 = vsub.f32 %v318, %v327
    %v332 = vsub.f32 %v321, %v330
    %v333 = vmul.f32 %v331, 1.442695
    %v334 = vpow.pop %v333
    %v335 = vmul.f32 %v332, 1.442695
    %v336 = vpow.pop %v335
    %v338 = vsel %vm324, %v334, 0
    %v341 = vsel %vm324, %v336, 0
    %343 = vmatprep.subr.mxu0 0.0
    %344 = vmatpush1.msra.mxu0 %v98
    %345 = vmatprep.subr.mxu0 0.0
    %346 = vmatpush1.msra.mxu0 %v99
    %347 = vmatprep.subr.mxu0 0.0
    %348 = vmatpush1.msra.mxu0 %v100
    %349 = vmatprep.subr.mxu0 0.0
    %350 = vmatpush1.msra.mxu0 %v101
    %351 = vmatprep.subr.mxu0 0.0
    %352 = vmatpush1.msra.mxu0 %v102
    %353 = vmatprep.subr.mxu0 0.0
    %354 = vmatpush1.msra.mxu0 %v103
    %355 = vmatprep.subr.mxu0 0.0
    %356 = vmatpush1.msra.mxu0 %v104
    %357 = vmatprep.subr.mxu0 0.0
    %358 = vmatpush1.msra.mxu0 %v105
    %359 = vmatprep.subr.mxu0 0.0
    %360 = vmatpush1.msra.mxu0 0.0
    %361 = vmatprep.subr.mxu0 0.0
    %362 = vmatpush1.msra.mxu0 0.0
    %363 = vmatprep.subr.mxu0 0.0
    %364 = vmatpush1.msra.mxu0 0.0
    %365 = vmatprep.subr.mxu0 0.0
    %366 = vmatpush1.msra.mxu0 0.0
    %367 = vmatprep.subr.mxu0 0.0
    %368 = vmatpush1.msra.mxu0 0.0
    %369 = vmatprep.subr.mxu0 0.0
    %370 = vmatpush1.msra.mxu0 0.0
    %371 = vmatprep.subr.mxu0 0.0
    %372 = vmatpush1.msra.mxu0 0.0
    %373 = vmatprep.subr.mxu0 0.0
    %374 = vmatpush1.msra.mxu0 0.0
    %375 = vmatprep.subr.mxu0 0.0
    %376 = vmatpush1.msra.mxu0 0.0
    %377 = vmatprep.subr.mxu0 0.0
    %378 = vmatpush1.msra.mxu0 0.0
    %379 = vmatprep.subr.mxu0 0.0
    %380 = vmatpush1.msra.mxu0 0.0
    %381 = vmatprep.subr.mxu0 0.0
    %382 = vmatpush1.msra.mxu0 0.0
    %383 = vmatprep.subr.mxu0 0.0
    %384 = vmatpush1.msra.mxu0 0.0
    %385 = vmatprep.subr.mxu0 0.0
    %386 = vmatpush1.msra.mxu0 0.0
    %387 = vmatprep.subr.mxu0 0.0
    %388 = vmatpush1.msra.mxu0 0.0
    %389 = vmatprep.subr.mxu0 0.0
    %390 = vmatpush1.msra.mxu0 0.0
    %391 = vmatprep.subr.mxu0 0.0
    %392 = vmatpush1.msra.mxu0 0.0
    %393 = vmatprep.subr.mxu0 0.0
    %394 = vmatpush1.msra.mxu0 0.0
    %395 = vmatprep.subr.mxu0 0.0
    %396 = vmatpush1.msra.mxu0 0.0
    %397 = vmatprep.subr.mxu0 0.0
    %398 = vmatpush1.msra.mxu0 0.0
    %399 = vmatprep.subr.mxu0 0.0
    %400 = vmatpush1.msra.mxu0 0.0
    %401 = vmatprep.subr.mxu0 0.0
    %402 = vmatpush1.msra.mxu0 0.0
    %403 = vmatprep.subr.mxu0 0.0
    %404 = vmatpush1.msra.mxu0 0.0
    %405 = vmatprep.subr.mxu0 0.0
    %406 = vmatpush1.msra.mxu0 0.0
    %407 = vmatprep.mubr.f32.mxu0 0.0
    %408 = vmatmul.mubr.f32.gmra.mrb[0].mxu0 %v338
    %v409 = vpop.f32.mrb[0].mxu0
    %v410 = vadd.f32 0.0, %v409
    %v411 = vpop.f32.mrb[0].mxu0
    %412 = vmatprep.mubr.f32.mxu0 0.0
    %413 = vmatmul.mubr.f32.gmra.mrb[0].mxu0 %v341
    %v414 = vpop.f32.mrb[0].mxu0
    %v415 = vadd.f32 0.0, %v414
    %v416 = vpop.f32.mrb[0].mxu0
    %417 = vdwg.mxu0
    %v418 = vrcp.pop %v410
    %v419 = vmul.f32 %v334, %v418
    %v420 = vrcp.pop %v415
    %v421 = vmul.f32 %v336, %v420
    %v422 = vpack.c.bf16 %v421, %v419
    %427 = vrot.lane.b32.xlu0 %v251, 64
    %v428 = vpop.permute.xlu0 %427
    %429 = vrot.lane.b32.xlu0 %v252, 64
    %v430 = vpop.permute.xlu0 %429
    %431 = vrot.lane.b32.xlu0 %v253, 64
    %v432 = vpop.permute.xlu0 %431
    %433 = vrot.lane.b32.xlu0 %v254, 64
    %v434 = vpop.permute.xlu0 %433
    %v440 = vsel %vm324, %v422, 0
    %442 = vmatprep.subr.bf16.mxu0 0
    %443 = vmatpush1.bf16.msra.mxu0 %v428
    %444 = vmatprep.subr.bf16.mxu0 0
    %445 = vmatpush1.bf16.msra.mxu0 %v430
    %446 = vmatprep.subr.bf16.mxu0 0
    %447 = vmatpush1.bf16.msra.mxu0 %v432
    %448 = vmatprep.subr.bf16.mxu0 0
    %449 = vmatpush1.bf16.msra.mxu0 %v434
    %450 = vmatprep.subr.bf16.mxu0 0
    %451 = vmatpush1.bf16.msra.mxu0 0
    %452 = vmatprep.subr.bf16.mxu0 0
    %453 = vmatpush1.bf16.msra.mxu0 0
    %454 = vmatprep.subr.bf16.mxu0 0
    %455 = vmatpush1.bf16.msra.mxu0 0
    %456 = vmatprep.subr.bf16.mxu0 0
    %457 = vmatpush1.bf16.msra.mxu0 0
    %458 = vmatprep.subr.bf16.mxu0 0
    %459 = vmatpush1.bf16.msra.mxu0 0
    %460 = vmatprep.subr.bf16.mxu0 0
    %461 = vmatpush1.bf16.msra.mxu0 0
    %462 = vmatprep.subr.bf16.mxu0 0
    %463 = vmatpush1.bf16.msra.mxu0 0
    %464 = vmatprep.subr.bf16.mxu0 0
    %465 = vmatpush1.bf16.msra.mxu0 0
    %466 = vmatprep.subr.bf16.mxu0 0
    %467 = vmatpush1.bf16.msra.mxu0 0
    %468 = vmatprep.subr.bf16.mxu0 0
    %469 = vmatpush1.bf16.msra.mxu0 0
    %470 = vmatprep.subr.bf16.mxu0 0
    %471 = vmatpush1.bf16.msra.mxu0 0
    %472 = vmatprep.subr.bf16.mxu0 0
    %473 = vmatpush1.bf16.msra.mxu0 0
    %474 = vmatprep.mubr.bf16.mxu0 0
    %475 = vmatmul.mubr.bf16.gmra.mrb[0].mxu0 %v440
    %v476 = vpop.f32.mrb[0].mxu0
    %v477 = vadd.f32 0.0, %v476
    %v478 = vpop.f32.mrb[0].mxu0
    %v479 = vpop.f32.mrb[0].mxu0
    %v480 = vadd.f32 0.0, %v479
    %v481 = vpop.f32.mrb[0].mxu0
    %482 = vdwg.mxu0
    %v483 = vpack.c.bf16 %v480, %v477
    %v484 = vld [vmem:[%s6] sm:$0xf]
    %v485 = vld [vmem:[%s6 + $0x4] sm:$0xf]
    %v486 = vld [vmem:[%s6 + $0x8] sm:$0xf]
    %v487 = vld [vmem:[%s6 + $0xc] sm:$0xf]
    %v488 = vld [vmem:[%s7] sm:$0x1]
    %v490 = vlaneseq
    %v491 = vshrl.u32 %v490, 7
    %v492 = vsub.s32 0, %v491
    %v493 = vrot.slane %v488, %v492
    %v499 = vunpack.c.l.b16 %v484
    %v500 = vunpack.c.l.b16 %v485
    %v501 = vunpack.c.l.b16 %v486
    %v502 = vunpack.c.l.b16 %v487
    %v503 = vpack.c.b16 %v500, %v499
    %v504 = vpack.c.b16 %v502, %v501
    %v508 = vsel %vm130, %v483, 0
    %510 = vmatprep.subr.bf16.mxu0 0
    %511 = vmatpush1.bf16.msra.mxu0 %v503
    %512 = vmatprep.subr.bf16.mxu0 0
    %513 = vmatpush1.bf16.msra.mxu0 %v504
    %514 = vmatprep.subr.bf16.mxu0 0
    %515 = vmatpush1.bf16.msra.mxu0 0
    %516 = vmatprep.subr.bf16.mxu0 0
    %517 = vmatpush1.bf16.msra.mxu0 0
    %518 = vmatprep.subr.bf16.mxu0 0
    %519 = vmatpush1.bf16.msra.mxu0 0
    %520 = vmatprep.subr.bf16.mxu0 0
    %521 = vmatpush1.bf16.msra.mxu0 0
    %522 = vmatprep.subr.bf16.mxu0 0
    %523 = vmatpush1.bf16.msra.mxu0 0
    %524 = vmatprep.subr.bf16.mxu0 0
    %525 = vmatpush1.bf16.msra.mxu0 0
    %526 = vmatprep.subr.bf16.mxu0 0
    %527 = vmatpush1.bf16.msra.mxu0 0
    %528 = vmatprep.subr.bf16.mxu0 0
    %529 = vmatpush1.bf16.msra.mxu0 0
    %530 = vmatprep.subr.bf16.mxu0 0
    %531 = vmatpush1.bf16.msra.mxu0 0
    %532 = vmatprep.subr.bf16.mxu0 0
    %533 = vmatpush1.bf16.msra.mxu0 0
    %534 = vmatprep.subr.bf16.mxu0 0
    %535 = vmatpush1.bf16.msra.mxu0 0
    %536 = vmatprep.subr.bf16.mxu0 0
    %537 = vmatpush1.bf16.msra.mxu0 0
    %538 = vmatprep.subr.bf16.mxu0 0
    %539 = vmatpush1.bf16.msra.mxu0 0
    %540 = vmatprep.subr.bf16.mxu0 0
    %541 = vmatpush1.bf16.msra.mxu0 0
    %542 = vmatprep.mubr.bf16.mxu0 0
    %543 = vmatmul.mubr.bf16.gmra.mrb[0].mxu0 %v508
    %v544 = vpop.f32.mrb[0].mxu0
    %v545 = vadd.f32 %v493, %v544
    %v546 = vpop.f32.mrb[0].mxu0
    %v547 = vpop.f32.mrb[0].mxu0
    %v548 = vadd.f32 %v493, %v547
    %v549 = vpop.f32.mrb[0].mxu0
    %550 = vdwg.mxu0
    %v551 = vadd.f32 %v86, %v545
    %v552 = vadd.f32 %v87, %v548
    %v553 = vld [vmem:[%s8] sm:$0x1]
    %v554 = vld [vmem:[%s9] sm:$0x1]
    %v555 = vsel %vm130, %v551, 0.0
    %556 = vadd.xlane.f32.xlu0 %v555
    %v557 = vpop.xlane.xlu0 %556
    %v558 = vsel %vm130, %v552, 0.0
    %559 = vadd.xlane.f32.xlu0 %v558
    %v560 = vpop.xlane.xlu0 %559
    %v561 = vrcp.pop 32.0
    %v562 = vmul.f32 %v557, %v561
    %v563 = vmul.f32 %v560, %v561
    %v564 = vmul.f32 %v551, %v551
    %v565 = vmul.f32 %v552, %v552
    %v566 = vsel %vm130, %v564, 0.0
    %567 = vadd.xlane.f32.xlu0 %v566
    %v568 = vpop.xlane.xlu0 %567
    %v569 = vsel %vm130, %v565, 0.0
    %570 = vadd.xlane.f32.xlu0 %v569
    %v571 = vpop.xlane.xlu0 %570
    %v572 = vmul.f32 %v568, %v561
    %v573 = vmul.f32 %v571, %v561
    %v574 = vmul.f32 %v562, %v562
    %v575 = vmul.f32 %v563, %v563
    %v576 = vsub.f32 %v572, %v574
    %v577 = vsub.f32 %v573, %v575
    %v578 = vsub.f32 %v551, %v562
    %v579 = vsub.f32 %v552, %v563
    %v580 = vadd.f32 %v576, 1e-05
    %v581 = vadd.f32 %v577, 1e-05
    %v582 = vrsqrt.pop %v580
    %v583 = vrsqrt.pop %v581
    %v584 = vmul.f32 %v578, %v582
    %v585 = vmul.f32 %v579, %v583
    %v587 = vlaneseq
    %v588 = vshrl.u32 %v587, 7
    %v589 = vsub.s32 0, %v588
    %v590 = vrot.slane %v553, %v589
    %v592 = vmul.f32 %v584, %v590
    %v593 = vmul.f32 %v585, %v590
    %v595 = vlaneseq
    %v596 = vshrl.u32 %v595, 7
    %v597 = vsub.s32 0, %v596
    %v598 = vrot.slane %v554, %v597
    %v600 = vadd.f32 %v592, %v598
    %v601 = vadd.f32 %v593, %v598
    %v602 = vpack.c.bf16 %v601, %v600
    %v603 = vld [vmem:[%s10] sm:$0xf]
    %v604 = vld [vmem:[%s10 + $0x4] sm:$0xf]
    %v605 = vld [vmem:[%s10 + $0x8] sm:$0xf]
    %v606 = vld [vmem:[%s10 + $0xc] sm:$0xf]
    %v607 = vld [vmem:[%s11] sm:$0x1]
    %v609 = vlaneseq
    %v610 = vshrl.u32 %v609, 7
    %v611 = vsub.s32 0, %v610
    %v612 = vrot.slane %v607, %v611
    %v618 = vunpack.c.l.b16 %v603
    %v619 = vunpack.c.l.b16 %v604
    %v620 = vunpack.c.l.b16 %v605
    %v621 = vunpack.c.l.b16 %v606
    %v622 = vpack.c.b16 %v619, %v618
    %v623 = vpack.c.b16 %v621, %v620
    %v627 = vsel %vm130, %v602, 0
    %629 = vmatprep.subr.bf16.mxu0 0
    %630 = vmatpush1.bf16.msra.mxu0 %v622
    %631 = vmatprep.subr.bf16.mxu0 0
    %632 = vmatpush1.bf16.msra.mxu0 %v623
    %633 = vmatprep.subr.bf16.mxu0 0
    %634 = vmatpush1.bf16.msra.mxu0 0
    %635 = vmatprep.subr.bf16.mxu0 0
    %636 = vmatpush1.bf16.msra.mxu0 0
    %637 = vmatprep.subr.bf16.mxu0 0
    %638 = vmatpush1.bf16.msra.mxu0 0
    %639 = vmatprep.subr.bf16.mxu0 0
    %640 = vmatpush1.bf16.msra.mxu0 0
    %641 = vmatprep.subr.bf16.mxu0 0
    %642 = vmatpush1.bf16.msra.mxu0 0
    %643 = vmatprep.subr.bf16.mxu0 0
    %644 = vmatpush1.bf16.msra.mxu0 0
    %645 = vmatprep.subr.bf16.mxu0 0
    %646 = vmatpush1.bf16.msra.mxu0 0
    %647 = vmatprep.subr.bf16.mxu0 0
    %648 = vmatpush1.bf16.msra.mxu0 0
    %649 = vmatprep.subr.bf16.mxu0 0
    %650 = vmatpush1.bf16.msra.mxu0 0
    %651 = vmatprep.subr.bf16.mxu0 0
    %652 = vmatpush1.bf16.msra.mxu0 0
    %653 = vmatprep.subr.bf16.mxu0 0
    %654 = vmatpush1.bf16.msra.mxu0 0
    %655 = vmatprep.subr.bf16.mxu0 0
    %656 = vmatpush1.bf16.msra.mxu0 0
    %657 = vmatprep.subr.bf16.mxu0 0
    %658 = vmatpush1.bf16.msra.mxu0 0
    %659 = vmatprep.subr.bf16.mxu0 0
    %660 = vmatpush1.bf16.msra.mxu0 0
    %661 = vmatprep.mubr.bf16.mxu0 0
    %662 = vmatmul.mubr.bf16.gmra.mrb[0].mxu0 %v627
    %v663 = vpop.f32.mrb[0].mxu0
    %v664 = vadd.f32 %v612, %v663
    %v665 = vpop.f32.mrb[0].mxu0
    %v666 = vpop.f32.mrb[0].mxu0
    %v667 = vadd.f32 %v612, %v666
    %v668 = vpop.f32.mrb[0].mxu0
    %669 = vdwg.mxu0
    %v670 = vmax.f32 %v664, 0.0
    %v671 = vmax.f32 %v667, 0.0
    %v672 = vpack.c.bf16 %v671, %v670
    %v673 = vld [vmem:[%s12] sm:$0xf]
    %v674 = vld [vmem:[%s12 + $0x4] sm:$0xf]
    %v675 = vld [vmem:[%s12 + $0x8] sm:$0xf]
    %v676 = vld [vmem:[%s12 + $0xc] sm:$0xf]
    %v677 = vld [vmem:[%s12 + $0x10] sm:$0xf]
    %v678 = vld [vmem:[%s12 + $0x14] sm:$0xf]
    %v679 = vld [vmem:[%s12 + $0x18] sm:$0xf]
    %v680 = vld [vmem:[%s12 + $0x1c] sm:$0xf]
    %v681 = vld [vmem:[%s13] sm:$0x1]
    %v683 = vlaneseq
    %v684 = vshrl.u32 %v683, 7
    %v685 = vsub.s32 0, %v684
    %v686 = vrot.slane %v681, %v685
    %v696 = vunpack.c.l.b16 %v673
    %v697 = vunpack.c.l.b16 %v674
    %v698 = vunpack.c.l.b16 %v675
    %v699 = vunpack.c.l.b16 %v676
    %v700 = vunpack.c.l.b16 %v677
    %v701 = vunpack.c.l.b16 %v678
    %v702 = vunpack.c.l.b16 %v679
    %v703 = vunpack.c.l.b16 %v680
    %v704 = vpack.c.b16 %v697, %v696
    %v705 = vpack.c.b16 %v699, %v698
    %v706 = vpack.c.b16 %v701, %v700
    %v707 = vpack.c.b16 %v703, %v702
    %v713 = vsel %vm324, %v672, 0
    %715 = vmatprep.subr.bf16.mxu0 0
    %716 = vmatpush1.bf16.msra.mxu0 %v704
    %717 = vmatprep.subr.bf16.mxu0 0
    %718 = vmatpush1.bf16.msra.mxu0 %v705
    %719 = vmatprep.subr.bf16.mxu0 0
    %720 = vmatpush1.bf16.msra.mxu0 %v706
    %721 = vmatprep.subr.bf16.mxu0 0
    %722 = vmatpush1.bf16.msra.mxu0 %v707
    %723 = vmatprep.subr.bf16.mxu0 0
    %724 = vmatpush1.bf16.msra.mxu0 0
    %725 = vmatprep.subr.bf16.mxu0 0
    %726 = vmatpush1.bf16.msra.mxu0 0
    %727 = vmatprep.subr.bf16.mxu0 0
    %728 = vmatpush1.bf16.msra.mxu0 0
    %729 = vmatprep.subr.bf16.mxu0 0
    %730 = vmatpush1.bf16.msra.mxu0 0
    %731 = vmatprep.subr.bf16.mxu0 0
    %732 = vmatpush1.bf16.msra.mxu0 0
    %733 = vmatprep.subr.bf16.mxu0 0
    %734 = vmatpush1.bf16.msra.mxu0 0
    %735 = vmatprep.subr.bf16.mxu0 0
    %736 = vmatpush1.bf16.msra.mxu0 0
    %737 = vmatprep.subr.bf16.mxu0 0
    %738 = vmatpush1.bf16.msra.mxu0 0
    %739 = vmatprep.subr.bf16.mxu0 0
    %740 = vmatpush1.bf16.msra.mxu0 0
    %741 = vmatprep.subr.bf16.mxu0 0
    %742 = vmatpush1.bf16.msra.mxu0 0
    %743 = vmatprep.subr.bf16.mxu0 0
    %744 = vmatpush1.bf16.msra.mxu0 0
    %745 = vmatprep.subr.bf16.mxu0 0
    %746 = vmatpush1.bf16.msra.mxu0 0
    %747 = vmatprep.mubr.bf16.mxu0 0
    %748 = vmatmul.mubr.bf16.gmra.mrb[0].mxu0 %v713
    %v749 = vpop.f32.mrb[0].mxu0
    %v750 = vadd.f32 %v686, %v749
    %v751 = vpop.f32.mrb[0].mxu0
    %v752 = vpop.f32.mrb[0].mxu0
    %v753 = vadd.f32 %v686, %v752
    %v754 = vpop.f32.mrb[0].mxu0
    %755 = vdwg.mxu0
    %v756 = vadd.f32 %v600, %v750
    %v757 = vadd.f32 %v601, %v753
    %v758 = vld [vmem:[%s14] sm:$0x1]
    %v759 = vld [vmem:[%s15] sm:$0x1]
    %v760 = vsel %vm130, %v756, 0.0
    %761 = vadd.xlane.f32.xlu0 %v760
    %v762 = vpop.xlane.xlu0 %761
    %v763 = vsel %vm130, %v757, 0.0
    %764 = vadd.xlane.f32.xlu0 %v763
    %v765 = vpop.xlane.xlu0 %764
    %v766 = vmul.f32 %v762, %v561
    %v767 = vmul.f32 %v765, %v561
    %v768 = vmul.f32 %v756, %v756
    %v769 = vmul.f32 %v757, %v757
    %v770 = vsel %vm130, %v768, 0.0
    %771 = vadd.xlane.f32.xlu0 %v770
    %v772 = vpop.xlane.xlu0 %771
    %v773 = vsel %vm130, %v769, 0.0
    %774 = vadd.xlane.f32.xlu0 %v773
    %v775 = vpop.xlane.xlu0 %774
    %v776 = vmul.f32 %v772, %v561
    %v777 = vmul.f32 %v775, %v561
    %v778 = vmul.f32 %v766, %v766
    %v779 = vmul.f32 %v767, %v767
    %v780 = vsub.f32 %v776, %v778
    %v781 = vsub.f32 %v777, %v779
    %v782 = vsub.f32 %v756, %v766
    %v783 = vsub.f32 %v757, %v767
    %v784 = vadd.f32 %v780, 1e-05
    %v785 = vadd.f32 %v781, 1e-05
    %v786 = vrsqrt.pop %v784
    %v787 = vrsqrt.pop %v785
    %v788 = vmul.f32 %v782, %v786
    %v789 = vmul.f32 %v783, %v787
    %v791 = vlaneseq
    %v792 = vshrl.u32 %v791, 7
    %v793 = vsub.s32 0, %v792
    %v794 = vrot.slane %v758, %v793
    %v796 = vmul.f32 %v788, %v794
    %v797 = vmul.f32 %v789, %v794
    %v799 = vlaneseq
    %v800 = vshrl.u32 %v799, 7
    %v801 = vsub.s32 0, %v800
    %v802 = vrot.slane %v759, %v801
    %v804 = vadd.f32 %v796, %v802
    %v805 = vadd.f32 %v797, %v802
    %v806 = vpack.c.bf16 %v805, %v804
    %s807 = scalar_lea.vmem %s4, 16
    %v808 = vld [vmem:[%s807] sm:$0xf]
    %v809 = vld [vmem:[%s807 + $0x4] sm:$0xf]
    %v810 = vld [vmem:[%s807 + $0x8] sm:$0xf]
    %v811 = vld [vmem:[%s807 + $0xc] sm:$0xf]
    %s812 = scalar_lea.vmem %s5, 1
    %v813 = vld [vmem:[%s812] sm:$0x1]
    %v815 = vlaneseq
    %v816 = vshrl.u32 %v815, 7
    %v817 = vsub.s32 0, %v816
    %v818 = vrot.slane %v813, %v817
    %v824 = vunpack.c.l.b16 %v808
    %v825 = vunpack.c.l.b16 %v809
    %v826 = vunpack.c.l.b16 %v810
    %v827 = vunpack.c.l.b16 %v811
    %v828 = vpack.c.b16 %v825, %v824
    %v829 = vpack.c.b16 %v827, %v826
    %v833 = vsel %vm130, %v806, 0
    %835 = vmatprep.subr.bf16.mxu0 0
    %836 = vmatpush1.bf16.msra.mxu0 %v828
    %837 = vmatprep.subr.bf16.mxu0 0
    %838 = vmatpush1.bf16.msra.mxu0 %v829
    %839 = vmatprep.subr.bf16.mxu0 0
    %840 = vmatpush1.bf16.msra.mxu0 0
    %841 = vmatprep.subr.bf16.mxu0 0
    %842 = vmatpush1.bf16.msra.mxu0 0
    %843 = vmatprep.subr.bf16.mxu0 0
    %844 = vmatpush1.bf16.msra.mxu0 0
    %845 = vmatprep.subr.bf16.mxu0 0
    %846 = vmatpush1.bf16.msra.mxu0 0
    %847 = vmatprep.subr.bf16.mxu0 0
    %848 = vmatpush1.bf16.msra.mxu0 0
    %849 = vmatprep.subr.bf16.mxu0 0
    %850 = vmatpush1.bf16.msra.mxu0 0
    %851 = vmatprep.subr.bf16.mxu0 0
    %852 = vmatpush1.bf16.msra.mxu0 0
    %853 = vmatprep.subr.bf16.mxu0 0
    %854 = vmatpush1.bf16.msra.mxu0 0
    %855 = vmatprep.subr.bf16.mxu0 0
    %856 = vmatpush1.bf16.msra.mxu0 0
    %857 = vmatprep.subr.bf16.mxu0 0
    %858 = vmatpush1.bf16.msra.mxu0 0
    %859 = vmatprep.subr.bf16.mxu0 0
    %860 = vmatpush1.bf16.msra.mxu0 0
    %861 = vmatprep.subr.bf16.mxu0 0
    %862 = vmatpush1.bf16.msra.mxu0 0
    %863 = vmatprep.subr.bf16.mxu0 0
    %864 = vmatpush1.bf16.msra.mxu0 0
    %865 = vmatprep.subr.bf16.mxu0 0
    %866 = vmatpush1.bf16.msra.mxu0 0
    %867 = vmatprep.mubr.bf16.mxu0 0
    %868 = vmatmul.mubr.bf16.gmra.mrb[0].mxu0 %v833
    %v869 = vpop.f32.mrb[0].mxu0
    %v870 = vadd.f32 %v818, %v869
    %v871 = vpop.f32.mrb[0].mxu0
    %v872 = vpop.f32.mrb[0].mxu0
    %v873 = vadd.f32 %v818, %v872
    %v874 = vpop.f32.mrb[0].mxu0
    %875 = vdwg.mxu0
    %v876 = vmul.f32 %v870, %v184
    %v877 = vmul.f32 %v873, %v186
    %v878 = vmul.f32 %v870, %v188
    %v879 = vmul.f32 %v873, %v190
    %v880 = vmul.f32 %v870, %v192
    %v881 = vmul.f32 %v873, %v194
    %v882 = vmul.f32 %v870, %v196
    %v883 = vmul.f32 %v873, %v198
    %v884 = vpack.c.bf16 %v877, %v876
    %v885 = vpack.c.bf16 %v879, %v878
    %v886 = vpack.c.bf16 %v881, %v880
    %v887 = vpack.c.bf16 %v883, %v882
    %v888 = vmul.f32 %v870, %v220
    %v889 = vmul.f32 %v873, %v222
    %v890 = vmul.f32 %v870, %v224
    %v891 = vmul.f32 %v873, %v226
    %v892 = vmul.f32 %v870, %v228
    %v893 = vmul.f32 %v873, %v230
    %v894 = vmul.f32 %v870, %v232
    %v895 = vmul.f32 %v873, %v234
    %v896 = vpack.c.bf16 %v889, %v888
    %v897 = vpack.c.bf16 %v891, %v890
    %v898 = vpack.c.bf16 %v893, %v892
    %v899 = vpack.c.bf16 %v895, %v894
    %v900 = vpack.c.bf16 %v873, %v870
    %905 = vrot.lane.b32.xlu0 %v884, 96
    %v906 = vpop.permute.xlu0 %905
    %907 = vrot.lane.b32.xlu0 %v885, 96
    %v908 = vpop.permute.xlu0 %907
    %909 = vrot.lane.b32.xlu0 %v886, 96
    %v910 = vpop.permute.xlu0 %909
    %911 = vrot.lane.b32.xlu0 %v887, 96
    %v912 = vpop.permute.xlu0 %911
    %v914 = vsel %vm130, %v900, 0
    %v917 = vsel %vm130, %v906, 0
    %v920 = vsel %vm130, %v908, 0
    %v923 = vsel %vm130, %v910, 0
    %v926 = vsel %vm130, %v912, 0
    %928 = vmatprep.subr.bf16.mxu0 0
    %929 = vmatpush1.bf16.xpose.msra.mxu0 %v917
    %930 = vmatprep.subr.bf16.mxu0 0
    %931 = vmatpush1.bf16.xpose.msra.mxu0 %v920
    %932 = vmatprep.subr.bf16.mxu0 0
    %933 = vmatpush1.bf16.xpose.msra.mxu0 %v923
    %934 = vmatprep.subr.bf16.mxu0 0
    %935 = vmatpush1.bf16.xpose.msra.mxu0 %v926
    %936 = vmatprep.subr.bf16.mxu0 0
    %937 = vmatpush1.bf16.xpose.msra.mxu0 0
    %938 = vmatprep.subr.bf16.mxu0 0
    %939 = vmatpush1.bf16.xpose.msra.mxu0 0
    %940 = vmatprep.subr.bf16.mxu0 0
    %941 = vmatpush1.bf16.xpose.msra.mxu0 0
    %942 = vmatprep.subr.bf16.mxu0 0
    %943 = vmatpush1.bf16.xpose.msra.mxu0 0
    %944 = vmatprep.subr.bf16.mxu0 0
    %945 = vmatpush1.bf16.xpose.msra.mxu0 0
    %946 = vmatprep.subr.bf16.mxu0 0
    %947 = vmatpush1.bf16.xpose.msra.mxu0 0
    %948 = vmatprep.subr.bf16.mxu0 0
    %949 = vmatpush1.bf16.xpose.msra.mxu0 0
    %950 = vmatprep.subr.bf16.mxu0 0
    %951 = vmatpush1.bf16.xpose.msra.mxu0 0
    %952 = vmatprep.subr.bf16.mxu0 0
    %953 = vmatpush1.bf16.xpose.msra.mxu0 0
    %954 = vmatprep.subr.bf16.mxu0 0
    %955 = vmatpush1.bf16.xpose.msra.mxu0 0
    %956 = vmatprep.subr.bf16.mxu0 0
    %957 = vmatpush1.bf16.xpose.msra.mxu0 0
    %958 = vmatprep.subr.bf16.mxu0 0
    %959 = vmatpush1.bf16.xpose.msra.mxu0 0
    %960 = vmatprep.mubr.bf16.mxu0 0
    %961 = vmatmul.mubr.bf16.gmra.mrb[0].mxu0 %v914
    %v962 = vpop.f32.mrb[0].mxu0
    %v963 = vadd.f32 %v88, %v962
    %v964 = vpop.f32.mrb[0].mxu0
    %v965 = vpop.f32.mrb[0].mxu0
    %v966 = vadd.f32 %v89, %v965
    %v967 = vpop.f32.mrb[0].mxu0
    %968 = vdwg.mxu0
    %v969 = vsel %vm324, %v963, -inf
    %970 = vmax.xlane.f32.xlu0 %v969
    %v971 = vpop.xlane.xlu0 %970
    %v972 = vsel %vm324, %v966, -inf
    %973 = vmax.xlane.f32.xlu0 %v972
    %v974 = vpop.xlane.xlu0 %973
    %v975 = vsub.f32 %v963, %v971
    %v976 = vsub.f32 %v966, %v974
    %v977 = vmul.f32 %v975, 1.442695
    %v978 = vpow.pop %v977
    %v979 = vmul.f32 %v976, 1.442695
    %v980 = vpow.pop %v979
    %v982 = vsel %vm324, %v978, 0
    %v985 = vsel %vm324, %v980, 0
    %987 = vmatprep.subr.mxu0 0.0
    %988 = vmatpush1.msra.mxu0 %v98
    %989 = vmatprep.subr.mxu0 0.0
    %990 = vmatpush1.msra.mxu0 %v99
    %991 = vmatprep.subr.mxu0 0.0
    %992 = vmatpush1.msra.mxu0 %v100
    %993 = vmatprep.subr.mxu0 0.0
    %994 = vmatpush1.msra.mxu0 %v101
    %995 = vmatprep.subr.mxu0 0.0
    %996 = vmatpush1.msra.mxu0 %v102
    %997 = vmatprep.subr.mxu0 0.0
    %998 = vmatpush1.msra.mxu0 %v103
    %999 = vmatprep.subr.mxu0 0.0
    %1000 = vmatpush1.msra.mxu0 %v104
    %1001 = vmatprep.subr.mxu0 0.0
    %1002 = vmatpush1.msra.mxu0 %v105
    %1003 = vmatprep.subr.mxu0 0.0
    %1004 = vmatpush1.msra.mxu0 0.0
    %1005 = vmatprep.subr.mxu0 0.0
    %1006 = vmatpush1.msra.mxu0 0.0
    %1007 = vmatprep.subr.mxu0 0.0
    %1008 = vmatpush1.msra.mxu0 0.0
    %1009 = vmatprep.subr.mxu0 0.0
    %1010 = vmatpush1.msra.mxu0 0.0
    %1011 = vmatprep.subr.mxu0 0.0
    %1012 = vmatpush1.msra.mxu0 0.0
    %1013 = vmatprep.subr.mxu0 0.0
    %1014 = vmatpush1.msra.mxu0 0.0
    %1015 = vmatprep.subr.mxu0 0.0
    %1016 = vmatpush1.msra.mxu0 0.0
    %1017 = vmatprep.subr.mxu0 0.0
    %1018 = vmatpush1.msra.mxu0 0.0
    %1019 = vmatprep.subr.mxu0 0.0
    %1020 = vmatpush1.msra.mxu0 0.0
    %1021 = vmatprep.subr.mxu0 0.0
    %1022 = vmatpush1.msra.mxu0 0.0
    %1023 = vmatprep.subr.mxu0 0.0
    %1024 = vmatpush1.msra.mxu0 0.0
    %1025 = vmatprep.subr.mxu0 0.0
    %1026 = vmatpush1.msra.mxu0 0.0
    %1027 = vmatprep.subr.mxu0 0.0
    %1028 = vmatpush1.msra.mxu0 0.0
    %1029 = vmatprep.subr.mxu0 0.0
    %1030 = vmatpush1.msra.mxu0 0.0
    %1031 = vmatprep.subr.mxu0 0.0
    %1032 = vmatpush1.msra.mxu0 0.0
    %1033 = vmatprep.subr.mxu0 0.0
    %1034 = vmatpush1.msra.mxu0 0.0
    %1035 = vmatprep.subr.mxu0 0.0
    %1036 = vmatpush1.msra.mxu0 0.0
    %1037 = vmatprep.subr.mxu0 0.0
    %1038 = vmatpush1.msra.mxu0 0.0
    %1039 = vmatprep.subr.mxu0 0.0
    %1040 = vmatpush1.msra.mxu0 0.0
    %1041 = vmatprep.subr.mxu0 0.0
    %1042 = vmatpush1.msra.mxu0 0.0
    %1043 = vmatprep.subr.mxu0 0.0
    %1044 = vmatpush1.msra.mxu0 0.0
    %1045 = vmatprep.subr.mxu0 0.0
    %1046 = vmatpush1.msra.mxu0 0.0
    %1047 = vmatprep.subr.mxu0 0.0
    %1048 = vmatpush1.msra.mxu0 0.0
    %1049 = vmatprep.subr.mxu0 0.0
    %1050 = vmatpush1.msra.mxu0 0.0
    %1051 = vmatprep.mubr.f32.mxu0 0.0
    %1052 = vmatmul.mubr.f32.gmra.mrb[0].mxu0 %v982
    %v1053 = vpop.f32.mrb[0].mxu0
    %v1054 = vadd.f32 0.0, %v1053
    %v1055 = vpop.f32.mrb[0].mxu0
    %1056 = vmatprep.mubr.f32.mxu0 0.0
    %1057 = vmatmul.mubr.f32.gmra.mrb[0].mxu0 %v985
    %v1058 = vpop.f32.mrb[0].mxu0
    %v1059 = vadd.f32 0.0, %v1058
    %v1060 = vpop.f32.mrb[0].mxu0
    %1061 = vdwg.mxu0
    %v1062 = vrcp.pop %v1054
    %v1063 = vmul.f32 %v978, %v1062
    %v1064 = vrcp.pop %v1059
    %v1065 = vmul.f32 %v980, %v1064
    %v1066 = vpack.c.bf16 %v1065, %v1063
    %1071 = vrot.lane.b32.xlu0 %v896, 64
    %v1072 = vpop.permute.xlu0 %1071
    %1073 = vrot.lane.b32.xlu0 %v897, 64
    %v1074 = vpop.permute.xlu0 %1073
    %1075 = vrot.lane.b32.xlu0 %v898, 64
    %v1076 = vpop.permute.xlu0 %1075
    %1077 = vrot.lane.b32.xlu0 %v899, 64
    %v1078 = vpop.permute.xlu0 %1077
    %v1084 = vsel %vm324, %v1066, 0
    %1086 = vmatprep.subr.bf16.mxu0 0
    %1087 = vmatpush1.bf16.msra.mxu0 %v1072
    %1088 = vmatprep.subr.bf16.mxu0 0
    %1089 = vmatpush1.bf16.msra.mxu0 %v1074
    %1090 = vmatprep.subr.bf16.mxu0 0
    %1091 = vmatpush1.bf16.msra.mxu0 %v1076
    %1092 = vmatprep.subr.bf16.mxu0 0
    %1093 = vmatpush1.bf16.msra.mxu0 %v1078
    %1094 = vmatprep.subr.bf16.mxu0 0
    %1095 = vmatpush1.bf16.msra.mxu0 0
    %1096 = vmatprep.subr.bf16.mxu0 0
    %1097 = vmatpush1.bf16.msra.mxu0 0
    %1098 = vmatprep.subr.bf16.mxu0 0
    %1099 = vmatpush1.bf16.msra.mxu0 0
    %1100 = vmatprep.subr.bf16.mxu0 0
    %1101 = vmatpush1.bf16.msra.mxu0 0
    %1102 = vmatprep.subr.bf16.mxu0 0
    %1103 = vmatpush1.bf16.msra.mxu0 0
    %1104 = vmatprep.subr.bf16.mxu0 0
    %1105 = vmatpush1.bf16.msra.mxu0 0
    %1106 = vmatprep.subr.bf16.mxu0 0
    %1107 = vmatpush1.bf16.msra.mxu0 0
    %1108 = vmatprep.subr.bf16.mxu0 0
    %1109 = vmatpush1.bf16.msra.mxu0 0
    %1110 = vmatprep.subr.bf16.mxu0 0
    %1111 = vmatpush1.bf16.msra.mxu0 0
    %1112 = vmatprep.subr.bf16.mxu0 0
    %1113 = vmatpush1.bf16.msra.mxu0 0
    %1114 = vmatprep.subr.bf16.mxu0 0
    %1115 = vmatpush1.bf16.msra.mxu0 0
    %1116 = vmatprep.subr.bf16.mxu0 0
    %1117 = vmatpush1.bf16.msra.mxu0 0
    %1118 = vmatprep.mubr.bf16.mxu0 0
    %1119 = vmatmul.mubr.bf16.gmra.mrb[0].mxu0 %v1084
    %v1120 = vpop.f32.mrb[0].mxu0
    %v1121 = vadd.f32 0.0, %v1120
    %v1122 = vpop.f32.mrb[0].mxu0
    %v1123 = vpop.f32.mrb[0].mxu0
    %v1124 = vadd.f32 0.0, %v1123
    %v1125 = vpop.f32.mrb[0].mxu0
    %1126 = vdwg.mxu0
    %v1127 = vpack.c.bf16 %v1124, %v1121
    %s1128 = scalar_lea.vmem %s6, 16
    %v1129 = vld [vmem:[%s1128] sm:$0xf]
    %v1130 = vld [vmem:[%s1128 + $0x4] sm:$0xf]
    %v1131 = vld [vmem:[%s1128 + $0x8] sm:$0xf]
    %v1132 = vld [vmem:[%s1128 + $0xc] sm:$0xf]
    %s1133 = scalar_lea.vmem %s7, 1
    %v1134 = vld [vmem:[%s1133] sm:$0x1]
    %v1136 = vlaneseq
    %v1137 = vshrl.u32 %v1136, 7
    %v1138 = vsub.s32 0, %v1137
    %v1139 = vrot.slane %v1134, %v1138
    %v1145 = vunpack.c.l.b16 %v1129
    %v1146 = vunpack.c.l.b16 %v1130
    %v1147 = vunpack.c.l.b16 %v1131
    %v1148 = vunpack.c.l.b16 %v1132
    %v1149 = vpack.c.b16 %v1146, %v1145
    %v1150 = vpack.c.b16 %v1148, %v1147
    %v1154 = vsel %vm130, %v1127, 0
    %1156 = vmatprep.subr.bf16.mxu0 0
    %1157 = vmatpush1.bf16.msra.mxu0 %v1149
    %1158 = vmatprep.subr.bf16.mxu0 0
    %1159 = vmatpush1.bf16.msra.mxu0 %v1150
    %1160 = vmatprep.subr.bf16.mxu0 0
    %1161 = vmatpush1.bf16.msra.mxu0 0
    %1162 = vmatprep.subr.bf16.mxu0 0
    %1163 = vmatpush1.bf16.msra.mxu0 0
    %1164 = vmatprep.subr.bf16.mxu0 0
    %1165 = vmatpush1.bf16.msra.mxu0 0
    %1166 = vmatprep.subr.bf16.mxu0 0
    %1167 = vmatpush1.bf16.msra.mxu0 0
    %1168 = vmatprep.subr.bf16.mxu0 0
    %1169 = vmatpush1.bf16.msra.mxu0 0
    %1170 = vmatprep.subr.bf16.mxu0 0
    %1171 = vmatpush1.bf16.msra.mxu0 0
    %1172 = vmatprep.subr.bf16.mxu0 0
    %1173 = vmatpush1.bf16.msra.mxu0 0
    %1174 = vmatprep.subr.bf16.mxu0 0
    %1175 = vmatpush1.bf16.msra.mxu0 0
    %1176 = vmatprep.subr.bf16.mxu0 0
    %1177 = vmatpush1.bf16.msra.mxu0 0
    %1178 = vmatprep.subr.bf16.mxu0 0
    %1179 = vmatpush1.bf16.msra.mxu0 0
    %1180 = vmatprep.subr.bf16.mxu0 0
    %1181 = vmatpush1.bf16.msra.mxu0 0
    %1182 = vmatprep.subr.bf16.mxu0 0
    %1183 = vmatpush1.bf16.msra.mxu0 0
    %1184 = vmatprep.subr.bf16.mxu0 0
    %1185 = vmatpush1.bf16.msra.mxu0 0
    %1186 = vmatprep.subr.bf16.mxu0 0
    %1187 = vmatpush1.bf16.msra.mxu0 0
    %1188 = vmatprep.mubr.bf16.mxu0 0
    %1189 = vmatmul.mubr.bf16.gmra.mrb[0].mxu0 %v1154
    %v1190 = vpop.f32.mrb[0].mxu0
    %v1191 = vadd.f32 %v1139, %v1190
    %v1192 = vpop.f32.mrb[0].mxu0
    %v1193 = vpop.f32.mrb[0].mxu0
    %v1194 = vadd.f32 %v1139, %v1193
    %v1195 = vpop.f32.mrb[0].mxu0
    %1196 = vdwg.mxu0
    %v1197 = vadd.f32 %v804, %v1191
    %v1198 = vadd.f32 %v805, %v1194
    %s1199 = scalar_lea.vmem %s8, 1
    %v1200 = vld [vmem:[%s1199] sm:$0x1]
    %s1201 = scalar_lea.vmem %s9, 1
    %v1202 = vld [vmem:[%s1201] sm:$0x1]
    %v1203 = vsel %vm130, %v1197, 0.0
    %1204 = vadd.xlane.f32.xlu0 %v1203
    %v1205 = vpop.xlane.xlu0 %1204
    %v1206 = vsel %vm130, %v1198, 0.0
    %1207 = vadd.xlane.f32.xlu0 %v1206
    %v1208 = vpop.xlane.xlu0 %1207
    %v1209 = vmul.f32 %v1205, %v561
    %v1210 = vmul.f32 %v1208, %v561
    %v1211 = vmul.f32 %v1197, %v1197
    %v1212 = vmul.f32 %v1198, %v1198
    %v1213 = vsel %vm130, %v1211, 0.0
    %1214 = vadd.xlane.f32.xlu0 %v1213
    %v1215 = vpop.xlane.xlu0 %1214
    %v1216 = vsel %vm130, %v1212, 0.0
    %1217 = vadd.xlane.f32.xlu0 %v1216
    %v1218 = vpop.xlane.xlu0 %1217
    %v1219 = vmul.f32 %v1215, %v561
    %v1220 = vmul.f32 %v1218, %v561
    %v1221 = vmul.f32 %v1209, %v1209
    %v1222 = vmul.f32 %v1210, %v1210
    %v1223 = vsub.f32 %v1219, %v1221
    %v1224 = vsub.f32 %v1220, %v1222
    %v1225 = vsub.f32 %v1197, %v1209
    %v1226 = vsub.f32 %v1198, %v1210
    %v1227 = vadd.f32 %v1223, 1e-05
    %v1228 = vadd.f32 %v1224, 1e-05
    %v1229 = vrsqrt.pop %v1227
    %v1230 = vrsqrt.pop %v1228
    %v1231 = vmul.f32 %v1225, %v1229
    %v1232 = vmul.f32 %v1226, %v1230
    %v1234 = vlaneseq
    %v1235 = vshrl.u32 %v1234, 7
    %v1236 = vsub.s32 0, %v1235
    %v1237 = vrot.slane %v1200, %v1236
    %v1239 = vmul.f32 %v1231, %v1237
    %v1240 = vmul.f32 %v1232, %v1237
    %v1242 = vlaneseq
    %v1243 = vshrl.u32 %v1242, 7
    %v1244 = vsub.s32 0, %v1243
    %v1245 = vrot.slane %v1202, %v1244
    %v1247 = vadd.f32 %v1239, %v1245
    %v1248 = vadd.f32 %v1240, %v1245
    %v1249 = vpack.c.bf16 %v1248, %v1247
    %s1250 = scalar_lea.vmem %s10, 16
    %v1251 = vld [vmem:[%s1250] sm:$0xf]
    %v1252 = vld [vmem:[%s1250 + $0x4] sm:$0xf]
    %v1253 = vld [vmem:[%s1250 + $0x8] sm:$0xf]
    %v1254 = vld [vmem:[%s1250 + $0xc] sm:$0xf]
    %s1255 = scalar_lea.vmem %s11, 1
    %v1256 = vld [vmem:[%s1255] sm:$0x1]
    %v1258 = vlaneseq
    %v1259 = vshrl.u32 %v1258, 7
    %v1260 = vsub.s32 0, %v1259
    %v1261 = vrot.slane %v1256, %v1260
    %v1267 = vunpack.c.l.b16 %v1251
    %v1268 = vunpack.c.l.b16 %v1252
    %v1269 = vunpack.c.l.b16 %v1253
    %v1270 = vunpack.c.l.b16 %v1254
    %v1271 = vpack.c.b16 %v1268, %v1267
    %v1272 = vpack.c.b16 %v1270, %v1269
    %v1276 = vsel %vm130, %v1249, 0
    %1278 = vmatprep.subr.bf16.mxu0 0
    %1279 = vmatpush1.bf16.msra.mxu0 %v1271
    %1280 = vmatprep.subr.bf16.mxu0 0
    %1281 = vmatpush1.bf16.msra.mxu0 %v1272
    %1282 = vmatprep.subr.bf16.mxu0 0
    %1283 = vmatpush1.bf16.msra.mxu0 0
    %1284 = vmatprep.subr.bf16.mxu0 0
    %1285 = vmatpush1.bf16.msra.mxu0 0
    %1286 = vmatprep.subr.bf16.mxu0 0
    %1287 = vmatpush1.bf16.msra.mxu0 0
    %1288 = vmatprep.subr.bf16.mxu0 0
    %1289 = vmatpush1.bf16.msra.mxu0 0
    %1290 = vmatprep.subr.bf16.mxu0 0
    %1291 = vmatpush1.bf16.msra.mxu0 0
    %1292 = vmatprep.subr.bf16.mxu0 0
    %1293 = vmatpush1.bf16.msra.mxu0 0
    %1294 = vmatprep.subr.bf16.mxu0 0
    %1295 = vmatpush1.bf16.msra.mxu0 0
    %1296 = vmatprep.subr.bf16.mxu0 0
    %1297 = vmatpush1.bf16.msra.mxu0 0
    %1298 = vmatprep.subr.bf16.mxu0 0
    %1299 = vmatpush1.bf16.msra.mxu0 0
    %1300 = vmatprep.subr.bf16.mxu0 0
    %1301 = vmatpush1.bf16.msra.mxu0 0
    %1302 = vmatprep.subr.bf16.mxu0 0
    %1303 = vmatpush1.bf16.msra.mxu0 0
    %1304 = vmatprep.subr.bf16.mxu0 0
    %1305 = vmatpush1.bf16.msra.mxu0 0
    %1306 = vmatprep.subr.bf16.mxu0 0
    %1307 = vmatpush1.bf16.msra.mxu0 0
    %1308 = vmatprep.subr.bf16.mxu0 0
    %1309 = vmatpush1.bf16.msra.mxu0 0
    %1310 = vmatprep.mubr.bf16.mxu0 0
    %1311 = vmatmul.mubr.bf16.gmra.mrb[0].mxu0 %v1276
    %v1312 = vpop.f32.mrb[0].mxu0
    %v1313 = vadd.f32 %v1261, %v1312
    %v1314 = vpop.f32.mrb[0].mxu0
    %v1315 = vpop.f32.mrb[0].mxu0
    %v1316 = vadd.f32 %v1261, %v1315
    %v1317 = vpop.f32.mrb[0].mxu0
    %1318 = vdwg.mxu0
    %v1319 = vmax.f32 %v1313, 0.0
    %v1320 = vmax.f32 %v1316, 0.0
    %v1321 = vpack.c.bf16 %v1320, %v1319
    %s1322 = scalar_lea.vmem %s12, 32
    %v1323 = vld [vmem:[%s1322] sm:$0xf]
    %v1324 = vld [vmem:[%s1322 + $0x4] sm:$0xf]
    %v1325 = vld [vmem:[%s1322 + $0x8] sm:$0xf]
    %v1326 = vld [vmem:[%s1322 + $0xc] sm:$0xf]
    %v1327 = vld [vmem:[%s1322 + $0x10] sm:$0xf]
    %v1328 = vld [vmem:[%s1322 + $0x14] sm:$0xf]
    %v1329 = vld [vmem:[%s1322 + $0x18] sm:$0xf]
    %v1330 = vld [vmem:[%s1322 + $0x1c] sm:$0xf]
    %s1331 = scalar_lea.vmem %s13, 1
    %v1332 = vld [vmem:[%s1331] sm:$0x1]
    %v1334 = vlaneseq
    %v1335 = vshrl.u32 %v1334, 7
    %v1336 = vsub.s32 0, %v1335
    %v1337 = vrot.slane %v1332, %v1336
    %v1347 = vunpack.c.l.b16 %v1323
    %v1348 = vunpack.c.l.b16 %v1324
    %v1349 = vunpack.c.l.b16 %v1325
    %v1350 = vunpack.c.l.b16 %v1326
    %v1351 = vunpack.c.l.b16 %v1327
    %v1352 = vunpack.c.l.b16 %v1328
    %v1353 = vunpack.c.l.b16 %v1329
    %v1354 = vunpack.c.l.b16 %v1330
    %v1355 = vpack.c.b16 %v1348, %v1347
    %v1356 = vpack.c.b16 %v1350, %v1349
    %v1357 = vpack.c.b16 %v1352, %v1351
    %v1358 = vpack.c.b16 %v1354, %v1353
    %v1364 = vsel %vm324, %v1321, 0
    %1366 = vmatprep.subr.bf16.mxu0 0
    %1367 = vmatpush1.bf16.msra.mxu0 %v1355
    %1368 = vmatprep.subr.bf16.mxu0 0
    %1369 = vmatpush1.bf16.msra.mxu0 %v1356
    %1370 = vmatprep.subr.bf16.mxu0 0
    %1371 = vmatpush1.bf16.msra.mxu0 %v1357
    %1372 = vmatprep.subr.bf16.mxu0 0
    %1373 = vmatpush1.bf16.msra.mxu0 %v1358
    %1374 = vmatprep.subr.bf16.mxu0 0
    %1375 = vmatpush1.bf16.msra.mxu0 0
    %1376 = vmatprep.subr.bf16.mxu0 0
    %1377 = vmatpush1.bf16.msra.mxu0 0
    %1378 = vmatprep.subr.bf16.mxu0 0
    %1379 = vmatpush1.bf16.msra.mxu0 0
    %1380 = vmatprep.subr.bf16.mxu0 0
    %1381 = vmatpush1.bf16.msra.mxu0 0
    %1382 = vmatprep.subr.bf16.mxu0 0
    %1383 = vmatpush1.bf16.msra.mxu0 0
    %1384 = vmatprep.subr.bf16.mxu0 0
    %1385 = vmatpush1.bf16.msra.mxu0 0
    %1386 = vmatprep.subr.bf16.mxu0 0
    %1387 = vmatpush1.bf16.msra.mxu0 0
    %1388 = vmatprep.subr.bf16.mxu0 0
    %1389 = vmatpush1.bf16.msra.mxu0 0
    %1390 = vmatprep.subr.bf16.mxu0 0
    %1391 = vmatpush1.bf16.msra.mxu0 0
    %1392 = vmatprep.subr.bf16.mxu0 0
    %1393 = vmatpush1.bf16.msra.mxu0 0
    %1394 = vmatprep.subr.bf16.mxu0 0
    %1395 = vmatpush1.bf16.msra.mxu0 0
    %1396 = vmatprep.subr.bf16.mxu0 0
    %1397 = vmatpush1.bf16.msra.mxu0 0
    %1398 = vmatprep.mubr.bf16.mxu0 0
    %1399 = vmatmul.mubr.bf16.gmra.mrb[0].mxu0 %v1364
    %v1400 = vpop.f32.mrb[0].mxu0
    %v1401 = vadd.f32 %v1337, %v1400
    %v1402 = vpop.f32.mrb[0].mxu0
    %v1403 = vpop.f32.mrb[0].mxu0
    %v1404 = vadd.f32 %v1337, %v1403
    %v1405 = vpop.f32.mrb[0].mxu0
    %1406 = vdwg.mxu0
    %v1407 = vadd.f32 %v1247, %v1401
    %v1408 = vadd.f32 %v1248, %v1404
    %s1409 = scalar_lea.vmem %s14, 1
    %v1410 = vld [vmem:[%s1409] sm:$0x1]
    %s1411 = scalar_lea.vmem %s15, 1
    %v1412 = vld [vmem:[%s1411] sm:$0x1]
    %v1413 = vsel %vm130, %v1407, 0.0
    %1414 = vadd.xlane.f32.xlu0 %v1413
    %v1415 = vpop.xlane.xlu0 %1414
    %v1416 = vsel %vm130, %v1408, 0.0
    %1417 = vadd.xlane.f32.xlu0 %v1416
    %v1418 = vpop.xlane.xlu0 %1417
    %v1419 = vmul.f32 %v1415, %v561
    %v1420 = vmul.f32 %v1418, %v561
    %v1421 = vmul.f32 %v1407, %v1407
    %v1422 = vmul.f32 %v1408, %v1408
    %v1423 = vsel %vm130, %v1421, 0.0
    %1424 = vadd.xlane.f32.xlu0 %v1423
    %v1425 = vpop.xlane.xlu0 %1424
    %v1426 = vsel %vm130, %v1422, 0.0
    %1427 = vadd.xlane.f32.xlu0 %v1426
    %v1428 = vpop.xlane.xlu0 %1427
    %v1429 = vmul.f32 %v1425, %v561
    %v1430 = vmul.f32 %v1428, %v561
    %v1431 = vmul.f32 %v1419, %v1419
    %v1432 = vmul.f32 %v1420, %v1420
    %v1433 = vsub.f32 %v1429, %v1431
    %v1434 = vsub.f32 %v1430, %v1432
    %v1435 = vsub.f32 %v1407, %v1419
    %v1436 = vsub.f32 %v1408, %v1420
    %v1437 = vadd.f32 %v1433, 1e-05
    %v1438 = vadd.f32 %v1434, 1e-05
    %v1439 = vrsqrt.pop %v1437
    %v1440 = vrsqrt.pop %v1438
    %v1441 = vmul.f32 %v1435, %v1439
    %v1442 = vmul.f32 %v1436, %v1440
    %v1444 = vlaneseq
    %v1445 = vshrl.u32 %v1444, 7
    %v1446 = vsub.s32 0, %v1445
    %v1447 = vrot.slane %v1410, %v1446
    %v1449 = vmul.f32 %v1441, %v1447
    %v1450 = vmul.f32 %v1442, %v1447
    %v1452 = vlaneseq
    %v1453 = vshrl.u32 %v1452, 7
    %v1454 = vsub.s32 0, %v1453
    %v1455 = vrot.slane %v1412, %v1454
    %v1457 = vadd.f32 %v1449, %v1455
    %v1458 = vadd.f32 %v1450, %v1455
    %1459 = vst.msk [vmem:[#allocation7] sm:$0xff] %vm130, %v1457
    %1460 = vst.msk [vmem:[#allocation7 + $0x8] sm:$0xff] %vm130, %v1458
    %1463 = vrot.lane.b32.xlu0 %v1063, 64
    %v1464 = vpop.permute.xlu0 %1463
    %1465 = vrot.lane.b32.xlu0 %v1065, 64
    %v1466 = vpop.permute.xlu0 %1465
    %v1469 = vsel %vm324, %v419, %v1464
    %v1470 = vsel %vm324, %v421, %v1466
    %1471 = vst [vmem:[#allocation8] sm:$0xff] %v1469
    %1472 = vst [vmem:[#allocation8 + $0x8] sm:$0xff] %v1470
    // Predicated region
    $region74: #{tpu_custom_call.1} parent=1 // pred_check
      _
    $region75: #{tpu_custom_call.1} parent=1 // pred_check_branch
      %1474 = sbr.rel (0) target = $region77
    $region76: #{tpu_custom_call.1} parent=1 // pred_region
      %s1476 = ssub.s32 256, 256
      %1477 = vsyncadd [#allocation4], %s1476
      %s1478 = sshll.u32 [#allocation7], 4
      %s1479 = int_to_ptr.vmem [resolvable:$true] %s1478
      %1484 = dma.vmem_to_hbm [thread:$0]  %s1479, 256, %s16, [#allocation4], 128, 128, 8
    $region77: #{tpu_custom_call.1} parent=1 // pred_fallthru
      _
    // Predicated region
    $region78: #{tpu_custom_call.1} parent=1 // pred_check
      _
    $region79: #{tpu_custom_call.1} parent=1 // pred_check_branch
      %1486 = sbr.rel (0) target = $region81
    $region80: #{tpu_custom_call.1} parent=1 // pred_region
      %s1488 = ssub.s32 256, 256
      %1489 = vsyncadd [#allocation9], %s1488
      %s1490 = sshll.u32 [#allocation8], 4
      %s1491 = int_to_ptr.vmem [resolvable:$true] %s1490
      %1496 = dma.vmem_to_hbm [thread:$0]  %s1491, 256, %s17, [#allocation9], 128, 128, 8
    $region81: #{tpu_custom_call.1} parent=1 // pred_fallthru
      _
    // Predicated region
    $region82: #{tpu_custom_call.1} parent=1 // pred_check
      _
    $region83: #{tpu_custom_call.1} parent=1 // pred_check_branch
      %1498 = sbr.rel (0) target = $region85
    $region84: #{tpu_custom_call.1} parent=1 // pred_region
      %1499 = dma.done [#allocation4], 256
    $region85: #{tpu_custom_call.1} parent=1 // pred_fallthru
      _
    // Predicated region
    $region86: #{tpu_custom_call.1} parent=1 // pred_check
      _
    $region87: #{tpu_custom_call.1} parent=1 // pred_check_branch
      %1501 = sbr.rel (0) target = $region89
    $region88: #{tpu_custom_call.1} parent=1 // pred_region
      %1502 = dma.done [#allocation9], 256
    $region89: #{tpu_custom_call.1} parent=1 // pred_fallthru
      _
    %1503 = vsyncpa [#allocation3], 1
    %1504 = vsyncpa [#allocation6], 1
    %1505 = vsyncpa [#allocation4], 1
    %1506 = vsyncpa [#allocation9], 1

</llo_original>
